<compile_context>
chip_gen: v7x
topology: tpu7x:2x2x1
jax: 0.10.0
libtpu: 0.0.40
codegen_flags: <defaults>
</compile_context>

<pallas_src>
import functools
import math

import jax
import jax.numpy as jnp
from jax.experimental import pallas as pl
from jax.experimental.pallas import tpu as pltpu

_EPS = 1e-5
_NEG = -1e9
_VMEM_LIMIT = 64 * 1024 * 1024          # raise scoped-VMEM default (16/32 MiB)


def _layernorm_f32(x, g, b):
    x = x.astype(jnp.float32)
    mu = jnp.mean(x, axis=-1, keepdims=True)
    var = jnp.mean((x - mu) ** 2, axis=-1, keepdims=True)     # biased variance (torch LayerNorm)
    xn = (x - mu) * jax.lax.rsqrt(var + _EPS)
    return xn * g.astype(jnp.float32) + b.astype(jnp.float32)


def _pick_tile(dim, target, align):
    """Largest tile <= target that divides dim and is `align`-aligned; else the full dim."""
    if dim <= target:
        return dim
    for t in range(min(dim, target), 0, -1):
        if dim % t == 0 and t % align == 0:
            return t
    return dim   # TODO(synk): masked tail handling instead of full-dim fallback


# ---------- kernel 1: LN1 + QKV proj + multi-head attention + out-proj + residual ----------

def _attn_kernel(x_ref, g_ref, b_ref, wqkv_ref, bqkv_ref, pad_ref, causal_ref,
                 wo_ref, bo_ref, o_ref, ctx_sc, *, num_heads):
    _, S, D = x_ref.shape
    dh = D // num_heads
    scale = 1.0 / math.sqrt(dh)
    cdt = wqkv_ref.dtype                                        # bf16 compute dtype

    # LN1 fused with the QKV projection — no (M, 3D) HBM round trip.
    xn = _layernorm_f32(x_ref[0], g_ref[...], b_ref[...])       # (S, D) f32
    qkv = jnp.dot(xn.astype(cdt), wqkv_ref[...],
                  preferred_element_type=jnp.float32)
    qkv = qkv + bqkv_ref[...].astype(jnp.float32)               # (S, 3D) f32

    # Additive mask built in-kernel from the (1,S) key padding and (S,S) causal masks.
    keep = (pad_ref[0] != 0) & (causal_ref[...] != 0)           # (S, S) bool
    bias = jnp.where(keep, 0.0, _NEG).astype(jnp.float32)

    for h in range(num_heads):                                  # static unroll over heads
        q = qkv[:, h * dh:(h + 1) * dh] * scale                 # fold softmax scale into q
        k = qkv[:, D + h * dh:D + (h + 1) * dh]
        v = qkv[:, 2 * D + h * dh:2 * D + (h + 1) * dh]
        # contract over d_head directly — no explicit k.T / XLU transpose
        s = jax.lax.dot_general(q.astype(cdt), k.astype(cdt),
                                (((1,), (1,)), ((), ())),
                                preferred_element_type=jnp.float32)
        s = s + bias
        m = jnp.max(s, axis=-1, keepdims=True)
        p = jnp.exp(s - m)
        denom = jnp.sum(p, axis=-1, keepdims=True)
        p = p * pl.reciprocal(denom, approx=True)               # EUP slot, frees VPU
        ctx_h = jnp.dot(p.astype(cdt), v.astype(cdt),
                        preferred_element_type=jnp.float32)
        ctx_sc[:, h * dh:(h + 1) * dh] = ctx_h.astype(ctx_sc.dtype)

    # ONE full-D output projection (full MXU contraction depth) instead of H dh-deep matmuls.
    out = jnp.dot(ctx_sc[...], wo_ref[...], preferred_element_type=jnp.float32)
    o_ref[0] = (x_ref[0].astype(jnp.float32) + out
                + bo_ref[...].astype(jnp.float32)).astype(o_ref.dtype)


def attn_sublayer(x, pad, causal, p):
    B, S, D = x.shape
    H = p["num_heads"]
    cdt = p["wqkv"].dtype
    flops = B * (2 * S * D * (3 * D) + 4 * S * S * D + 2 * S * D * D)
    bytes_accessed = (2 * x.size * x.dtype.itemsize
                      + p["wqkv"].size * jnp.dtype(cdt).itemsize
                      + p["wo"].size * jnp.dtype(cdt).itemsize
                      + pad.size * 4 + causal.size * 4)
    kern = functools.partial(_attn_kernel, num_heads=H)
    return pl.pallas_call(
        kern,
        out_shape=jax.ShapeDtypeStruct((B, S, D), x.dtype),
        grid=(B,),
        in_specs=[pl.BlockSpec((1, S, D), lambda b: (b, 0, 0)),
                  pl.BlockSpec((1, D), lambda b: (0, 0)),
                  pl.BlockSpec((1, D), lambda b: (0, 0)),
                  pl.BlockSpec((D, 3 * D), lambda b: (0, 0)),
                  pl.BlockSpec((1, 3 * D), lambda b: (0, 0)),
                  pl.BlockSpec((1, 1, S), lambda b: (b, 0, 0)),
                  pl.BlockSpec((S, S), lambda b: (0, 0)),
                  pl.BlockSpec((D, D), lambda b: (0, 0)),
                  pl.BlockSpec((1, D), lambda b: (0, 0))],
        out_specs=pl.BlockSpec((1, S, D), lambda b: (b, 0, 0)),
        scratch_shapes=[pltpu.VMEM((S, D), cdt)],               # per-head context staging
        compiler_params=pltpu.CompilerParams(
            dimension_semantics=("parallel",),
            vmem_limit_bytes=_VMEM_LIMIT),
        cost_estimate=pl.CostEstimate(flops=int(flops),
                                      transcendentals=int(B * H * S * S),
                                      bytes_accessed=int(bytes_accessed)),
    )(x, p["ln1_g"], p["ln1_b"], p["wqkv"], p["bqkv"], pad, causal,
      p["wo"], p["bo"])


# ------------- kernel 2: LN2 + W1 + ReLU + W2 + residual (tiled over d_ff) -------------

def _ffn_kernel(x_ref, g_ref, b_ref, w1_ref, b1_ref, w2_ref, b2_ref, o_ref,
                xn_sc, acc_sc):
    f = pl.program_id(1)

    @pl.when(f == 0)
    def _():
        # LayerNorm once per row tile; cached in the matmul dtype (bf16) — cast once, not per f.
        xn_sc[...] = _layernorm_f32(x_ref[...], g_ref[...], b_ref[...]).astype(xn_sc.dtype)
        acc_sc[...] = jnp.zeros_like(acc_sc)

    h = jnp.dot(xn_sc[...], w1_ref[...], preferred_element_type=jnp.float32)
    h = jnp.maximum(h + b1_ref[...].astype(jnp.float32), 0.0)
    acc_sc[...] += jnp.dot(h.astype(w2_ref.dtype), w2_ref[...],
                           preferred_element_type=jnp.float32)

    @pl.when(f == pl.num_programs(1) - 1)
    def _():
        o_ref[...] = (x_ref[...].astype(jnp.float32) + acc_sc[...]
                      + b2_ref[...].astype(jnp.float32)).astype(o_ref.dtype)


def ffn_sublayer(x2d, p, *, row_tile=512, ff_tile=1024):
    M, D = x2d.shape
    F = p["w1"].shape[1]
    cdt = p["w1"].dtype
    tm = _pick_tile(M, row_tile, 8)       # sublane-aligned row tile
    tf = _pick_tile(F, ff_tile, 128)      # lane-aligned d_ff tile
    flops = 4 * M * D * F
    bytes_accessed = (2 * M * D * x2d.dtype.itemsize
                      + (M // tm) * 2 * D * F * jnp.dtype(cdt).itemsize)
    return pl.pallas_call(
        _ffn_kernel,
        out_shape=jax.ShapeDtypeStruct((M, D), x2d.dtype),
        grid=(M // tm, F // tf),
        in_specs=[pl.BlockSpec((tm, D), lambda i, f: (i, 0)),
                  pl.BlockSpec((1, D), lambda i, f: (0, 0)),
                  pl.BlockSpec((1, D), lambda i, f: (0, 0)),
                  pl.BlockSpec((D, tf), lambda i, f: (0, f)),
                  pl.BlockSpec((1, tf), lambda i, f: (0, f)),
                  pl.BlockSpec((tf, D), lambda i, f: (f, 0)),
                  pl.BlockSpec((1, D), lambda i, f: (0, 0))],
        out_specs=pl.BlockSpec((tm, D), lambda i, f: (i, 0)),
        scratch_shapes=[pltpu.VMEM((tm, D), cdt),               # LN output, matmul dtype
                        pltpu.VMEM((tm, D), jnp.float32)],      # f32 accumulator
        compiler_params=pltpu.CompilerParams(
            dimension_semantics=("parallel", "arbitrary"),
            vmem_limit_bytes=_VMEM_LIMIT),
        cost_estimate=pl.CostEstimate(flops=int(flops), transcendentals=0,
                                      bytes_accessed=int(bytes_accessed)),
    )(x2d, p["ln2_g"], p["ln2_b"], p["w1"], p["b1"], p["w2"], p["b2"])


# ------------------------------- layer forward -------------------------------

def encoder_layer_forward(params, x, mask_padding, mask_causal):
    B, S, D = x.shape
    pad = mask_padding.astype(jnp.int32).reshape(B, 1, S)
    causal = mask_causal.astype(jnp.int32)

    # sublayer 0: x + SelfAttn(LN1(x))  (LN1 + QKV proj fused into the attention kernel)
    x = attn_sublayer(x, pad, causal, params)

    # sublayer 1: x + FFN(LN2(x))
    x2 = ffn_sublayer(x.reshape(B * S, D), params)
    return x2.reshape(B, S, D)


# ----------------------------- param construction ----------------------------

def init_params(key, d_model, n_heads, d_ff, *, compute_dtype=jnp.bfloat16):
    def dense(k, fan_in, fan_out):
        kw, kb = jax.random.split(k)
        lim = 1.0 / math.sqrt(fan_in)
        w = jax.random.uniform(kw, (fan_in, fan_out), jnp.float32, -lim, lim)
        b = jax.random.uniform(kb, (1, fan_out), jnp.float32, -lim, lim)
        return w, b

    ks = jax.random.split(key, 6)
    wq, bq = dense(ks[0], d_model, d_model)
    wk, bk = dense(ks[1], d_model, d_model)
    wv, bv = dense(ks[2], d_model, d_model)
    wo, bo = dense(ks[3], d_model, d_model)
    w1, b1 = dense(ks[4], d_model, d_ff)
    w2, b2 = dense(ks[5], d_ff, d_model)
    return dict(
        num_heads=n_heads,
        # MXU operands stored in bf16 (native MXU rate, half the HBM/VMEM traffic);
        # biases and LayerNorm params stay f32 (added after f32 accumulation).
        wqkv=jnp.concatenate([wq, wk, wv], axis=1).astype(compute_dtype),   # fused (D, 3D)
        bqkv=jnp.concatenate([bq, bk, bv], axis=1),                         # (1, 3D) f32
        wo=wo.astype(compute_dtype), bo=bo,
        w1=w1.astype(compute_dtype), b1=b1,
        w2=w2.astype(compute_dtype), b2=b2,
        ln1_g=jnp.ones((1, d_model), jnp.float32),
        ln1_b=jnp.zeros((1, d_model), jnp.float32),
        ln2_g=jnp.ones((1, d_model), jnp.float32),
        ln2_b=jnp.zeros((1, d_model), jnp.float32),
    )


# ------------------------------------ main ------------------------------------

if __name__ == "__main__":
    B, S, D = 2, 8, 32
    H, D_FF = 4, 64

    key = jax.random.PRNGKey(0)
    kx, kp = jax.random.split(key)
    x = jax.random.normal(kx, (B, S, D), jnp.float32)

    # padding mask: batch 0 fully valid, batch 1 has last 2 positions padded (True = keep)
    mask_padding = jnp.array(
        [[True] * S,
         [True] * (S - 2) + [False] * 2], dtype=bool)            # (B, S)
    # causal mask: lower triangular (True = keep)
    mask_causal = jnp.tril(jnp.ones((S, S), dtype=bool))         # (S, S)

    params = init_params(kp, D, H, D_FF)

    out = encoder_layer_forward(params, x, mask_padding, mask_causal)
    out = jax.block_until_ready(out)
    assert out.shape == (B, S, D) and out.dtype == jnp.float32
    assert bool(jnp.all(jnp.isfinite(out)))
    print("KERNEL_OK")
</pallas_src>

<mosaic_0001>
module attributes {stable_mosaic.version = 11 : i64} {
  func.func @_attn_kernel(%arg0: i32, %arg1: memref<1x8x32xf32, #tpu.memory_space<vmem>>, %arg2: memref<1x32xf32, #tpu.memory_space<vmem>>, %arg3: memref<1x32xf32, #tpu.memory_space<vmem>>, %arg4: memref<32x96xbf16, #tpu.memory_space<vmem>>, %arg5: memref<1x96xf32, #tpu.memory_space<vmem>>, %arg6: memref<1x1x8xi32, #tpu.memory_space<vmem>>, %arg7: memref<8x8xi32, #tpu.memory_space<vmem>>, %arg8: memref<32x32xbf16, #tpu.memory_space<vmem>>, %arg9: memref<1x32xf32, #tpu.memory_space<vmem>>, %arg10: memref<1x8x32xf32, #tpu.memory_space<vmem>>, %arg11: memref<8x32xbf16, #tpu.memory_space<vmem>>) attributes {dimension_semantics = [#tpu.dimension_semantics<parallel>], iteration_bounds = array<i64: 2>, scalar_prefetch = 0 : i64, scratch_operands = 1 : i64, tpu.core_type = #tpu.core_type<tc>, window_params = [{transform_indices = @transform_0, window_bounds = array<i64: 1, 8, 32>}, {pipeline_mode = #tpu.pipeline_mode<synchronous>, transform_indices = @transform_1, window_bounds = array<i64: 1, 32>}, {pipeline_mode = #tpu.pipeline_mode<synchronous>, transform_indices = @transform_2, window_bounds = array<i64: 1, 32>}, {pipeline_mode = #tpu.pipeline_mode<synchronous>, transform_indices = @transform_3, window_bounds = array<i64: 32, 96>}, {pipeline_mode = #tpu.pipeline_mode<synchronous>, transform_indices = @transform_4, window_bounds = array<i64: 1, 96>}, {transform_indices = @transform_5, window_bounds = array<i64: 1, 1, 8>}, {pipeline_mode = #tpu.pipeline_mode<synchronous>, transform_indices = @transform_6, window_bounds = array<i64: 8, 8>}, {pipeline_mode = #tpu.pipeline_mode<synchronous>, transform_indices = @transform_7, window_bounds = array<i64: 32, 32>}, {pipeline_mode = #tpu.pipeline_mode<synchronous>, transform_indices = @transform_8, window_bounds = array<i64: 1, 32>}, {transform_indices = @transform_9, window_bounds = array<i64: 1, 8, 32>}]} {
    %c0 = arith.constant 0 : index
    %c0_0 = arith.constant 0 : index
    %c0_1 = arith.constant 0 : index
    %0 = vector.load %arg1[%c0, %c0_0, %c0_1] : memref<1x8x32xf32, #tpu.memory_space<vmem>>, vector<1x8x32xf32>
    %1 = vector.shape_cast %0 : vector<1x8x32xf32> to vector<8x32xf32>
    %c0_2 = arith.constant 0 : index
    %c0_3 = arith.constant 0 : index
    %2 = vector.load %arg2[%c0_2, %c0_3] : memref<1x32xf32, #tpu.memory_space<vmem>>, vector<1x32xf32>
    %c0_4 = arith.constant 0 : index
    %c0_5 = arith.constant 0 : index
    %3 = vector.load %arg3[%c0_4, %c0_5] : memref<1x32xf32, #tpu.memory_space<vmem>>, vector<1x32xf32>
    %cst = arith.constant dense<0.000000e+00> : vector<8xf32>
    %4 = vector.multi_reduction <add>, %1, %cst [1] : vector<8x32xf32> to vector<8xf32>
    %5 = vector.shape_cast %4 : vector<8xf32> to vector<8x1xf32>
    %cst_6 = arith.constant 3.200000e+01 : f32
    %6 = vector.broadcast %cst_6 : f32 to vector<8x1xf32>
    %7 = arith.divf %5, %6 : vector<8x1xf32>
    %8 = vector.broadcast %7 : vector<8x1xf32> to vector<8x32xf32>
    %9 = arith.subf %1, %8 : vector<8x32xf32>
    %10 = arith.mulf %9, %9 : vector<8x32xf32>
    %cst_7 = arith.constant dense<0.000000e+00> : vector<8xf32>
    %11 = vector.multi_reduction <add>, %10, %cst_7 [1] : vector<8x32xf32> to vector<8xf32>
    %12 = vector.shape_cast %11 : vector<8xf32> to vector<8x1xf32>
    %cst_8 = arith.constant 3.200000e+01 : f32
    %13 = vector.broadcast %cst_8 : f32 to vector<8x1xf32>
    %14 = arith.divf %12, %13 : vector<8x1xf32>
    %15 = vector.broadcast %7 : vector<8x1xf32> to vector<8x32xf32>
    %16 = arith.subf %1, %15 : vector<8x32xf32>
    %cst_9 = arith.constant 9.99999974E-6 : f32
    %17 = vector.broadcast %cst_9 : f32 to vector<8x1xf32>
    %18 = arith.addf %14, %17 : vector<8x1xf32>
    %19 = math.rsqrt %18 : vector<8x1xf32>
    %20 = vector.broadcast %19 : vector<8x1xf32> to vector<8x32xf32>
    %21 = arith.mulf %16, %20 : vector<8x32xf32>
    %22 = vector.broadcast %2 : vector<1x32xf32> to vector<8x32xf32>
    %23 = arith.mulf %21, %22 : vector<8x32xf32>
    %24 = vector.broadcast %3 : vector<1x32xf32> to vector<8x32xf32>
    %25 = arith.addf %23, %24 : vector<8x32xf32>
    %26 = arith.truncf %25 : vector<8x32xf32> to vector<8x32xbf16>
    %c0_10 = arith.constant 0 : index
    %c0_11 = arith.constant 0 : index
    %27 = vector.load %arg4[%c0_10, %c0_11] : memref<32x96xbf16, #tpu.memory_space<vmem>>, vector<32x96xbf16>
    %cst_12 = arith.constant dense<0.000000e+00> : vector<8x96xf32>
    %28 = tpu.matmul %26, %27, %cst_12 {dimension_numbers = #tpu.dot_dimension_numbers<[1], [0], [0], [1], [0, 0, 1, 1], [], []>} : vector<8x32xbf16>, vector<32x96xbf16>, vector<8x96xf32> -> vector<8x96xf32>
    %c0_13 = arith.constant 0 : index
    %c0_14 = arith.constant 0 : index
    %29 = vector.load %arg5[%c0_13, %c0_14] : memref<1x96xf32, #tpu.memory_space<vmem>>, vector<1x96xf32>
    %30 = vector.broadcast %29 : vector<1x96xf32> to vector<8x96xf32>
    %31 = arith.addf %28, %30 : vector<8x96xf32>
    %c0_15 = arith.constant 0 : index
    %c0_16 = arith.constant 0 : index
    %c0_17 = arith.constant 0 : index
    %32 = vector.load %arg6[%c0_15, %c0_16, %c0_17] : memref<1x1x8xi32, #tpu.memory_space<vmem>>, vector<1x1x8xi32>
    %33 = vector.shape_cast %32 : vector<1x1x8xi32> to vector<1x8xi32>
    %c0_i32 = arith.constant 0 : i32
    %34 = vector.broadcast %c0_i32 : i32 to vector<1x8xi32>
    %35 = arith.cmpi ne, %33, %34 : vector<1x8xi32>
    %c0_18 = arith.constant 0 : index
    %c0_19 = arith.constant 0 : index
    %36 = vector.load %arg7[%c0_18, %c0_19] : memref<8x8xi32, #tpu.memory_space<vmem>>, vector<8x8xi32>
    %c0_i32_20 = arith.constant 0 : i32
    %37 = vector.broadcast %c0_i32_20 : i32 to vector<8x8xi32>
    %38 = arith.cmpi ne, %36, %37 : vector<8x8xi32>
    %39 = vector.broadcast %35 : vector<1x8xi1> to vector<8x8xi1>
    %40 = arith.andi %39, %38 : vector<8x8xi1>
    %cst_21 = arith.constant 0.000000e+00 : f32
    %cst_22 = arith.constant -1.000000e+09 : f32
    %41 = vector.broadcast %cst_21 : f32 to vector<8x8xf32>
    %42 = vector.broadcast %cst_22 : f32 to vector<8x8xf32>
    %43 = arith.select %40, %41, %42 : vector<8x8xi1>, vector<8x8xf32>
    %44 = vector.extract_strided_slice %31 {offsets = [0, 0], sizes = [8, 8], strides = [1, 1]} : vector<8x96xf32> to vector<8x8xf32>
    %cst_23 = arith.constant 0.353553385 : f32
    %45 = vector.broadcast %cst_23 : f32 to vector<8x8xf32>
    %46 = arith.mulf %44, %45 : vector<8x8xf32>
    %47 = vector.extract_strided_slice %31 {offsets = [0, 32], sizes = [8, 8], strides = [1, 1]} : vector<8x96xf32> to vector<8x8xf32>
    %48 = vector.extract_strided_slice %31 {offsets = [0, 64], sizes = [8, 8], strides = [1, 1]} : vector<8x96xf32> to vector<8x8xf32>
    %49 = arith.truncf %46 : vector<8x8xf32> to vector<8x8xbf16>
    %50 = arith.truncf %47 : vector<8x8xf32> to vector<8x8xbf16>
    %cst_24 = arith.constant dense<0.000000e+00> : vector<8x8xf32>
    %51 = tpu.matmul %49, %50, %cst_24 {dimension_numbers = #tpu.dot_dimension_numbers<[1], [1], [0], [0], [0, 0, 1, 0], [], []>} : vector<8x8xbf16>, vector<8x8xbf16>, vector<8x8xf32> -> vector<8x8xf32>
    %52 = arith.addf %51, %43 : vector<8x8xf32>
    %cst_25 = arith.constant dense<0xFF800000> : vector<8xf32>
    %53 = vector.multi_reduction <maximumf>, %52, %cst_25 [1] : vector<8x8xf32> to vector<8xf32>
    %54 = vector.shape_cast %53 : vector<8xf32> to vector<8x1xf32>
    %55 = vector.broadcast %54 : vector<8x1xf32> to vector<8x8xf32>
    %56 = arith.subf %52, %55 : vector<8x8xf32>
    %57 = math.exp %56 : vector<8x8xf32>
    %cst_26 = arith.constant dense<0.000000e+00> : vector<8xf32>
    %58 = vector.multi_reduction <add>, %57, %cst_26 [1] : vector<8x8xf32> to vector<8xf32>
    %59 = vector.shape_cast %58 : vector<8xf32> to vector<8x1xf32>
    %60 = tpu.reciprocal %59 {approx = true} : vector<8x1xf32> -> vector<8x1xf32>
    %61 = vector.broadcast %60 : vector<8x1xf32> to vector<8x8xf32>
    %62 = arith.mulf %57, %61 : vector<8x8xf32>
    %63 = arith.truncf %62 : vector<8x8xf32> to vector<8x8xbf16>
    %64 = arith.truncf %48 : vector<8x8xf32> to vector<8x8xbf16>
    %cst_27 = arith.constant dense<0.000000e+00> : vector<8x8xf32>
    %65 = tpu.matmul %63, %64, %cst_27 {dimension_numbers = #tpu.dot_dimension_numbers<[1], [0], [0], [1], [0, 0, 1, 1], [], []>} : vector<8x8xbf16>, vector<8x8xbf16>, vector<8x8xf32> -> vector<8x8xf32>
    %66 = arith.truncf %65 : vector<8x8xf32> to vector<8x8xbf16>
    %c0_28 = arith.constant 0 : index
    %c0_29 = arith.constant 0 : index
    %67 = vector.load %arg11[%c0_28, %c0_29] : memref<8x32xbf16, #tpu.memory_space<vmem>>, vector<8x8xbf16>
    tpu.vector_store %arg11[%c0_28, %c0_29], %66 {strides = array<i32>} : memref<8x32xbf16, #tpu.memory_space<vmem>>, vector<8x8xbf16>,
    %68 = vector.extract_strided_slice %31 {offsets = [0, 8], sizes = [8, 8], strides = [1, 1]} : vector<8x96xf32> to vector<8x8xf32>
    %cst_30 = arith.constant 0.353553385 : f32
    %69 = vector.broadcast %cst_30 : f32 to vector<8x8xf32>
    %70 = arith.mulf %68, %69 : vector<8x8xf32>
    %71 = vector.extract_strided_slice %31 {offsets = [0, 40], sizes = [8, 8], strides = [1, 1]} : vector<8x96xf32> to vector<8x8xf32>
    %72 = vector.extract_strided_slice %31 {offsets = [0, 72], sizes = [8, 8], strides = [1, 1]} : vector<8x96xf32> to vector<8x8xf32>
    %73 = arith.truncf %70 : vector<8x8xf32> to vector<8x8xbf16>
    %74 = arith.truncf %71 : vector<8x8xf32> to vector<8x8xbf16>
    %cst_31 = arith.constant dense<0.000000e+00> : vector<8x8xf32>
    %75 = tpu.matmul %73, %74, %cst_31 {dimension_numbers = #tpu.dot_dimension_numbers<[1], [1], [0], [0], [0, 0, 1, 0], [], []>} : vector<8x8xbf16>, vector<8x8xbf16>, vector<8x8xf32> -> vector<8x8xf32>
    %76 = arith.addf %75, %43 : vector<8x8xf32>
    %cst_32 = arith.constant dense<0xFF800000> : vector<8xf32>
    %77 = vector.multi_reduction <maximumf>, %76, %cst_32 [1] : vector<8x8xf32> to vector<8xf32>
    %78 = vector.shape_cast %77 : vector<8xf32> to vector<8x1xf32>
    %79 = vector.broadcast %78 : vector<8x1xf32> to vector<8x8xf32>
    %80 = arith.subf %76, %79 : vector<8x8xf32>
    %81 = math.exp %80 : vector<8x8xf32>
    %cst_33 = arith.constant dense<0.000000e+00> : vector<8xf32>
    %82 = vector.multi_reduction <add>, %81, %cst_33 [1] : vector<8x8xf32> to vector<8xf32>
    %83 = vector.shape_cast %82 : vector<8xf32> to vector<8x1xf32>
    %84 = tpu.reciprocal %83 {approx = true} : vector<8x1xf32> -> vector<8x1xf32>
    %85 = vector.broadcast %84 : vector<8x1xf32> to vector<8x8xf32>
    %86 = arith.mulf %81, %85 : vector<8x8xf32>
    %87 = arith.truncf %86 : vector<8x8xf32> to vector<8x8xbf16>
    %88 = arith.truncf %72 : vector<8x8xf32> to vector<8x8xbf16>
    %cst_34 = arith.constant dense<0.000000e+00> : vector<8x8xf32>
    %89 = tpu.matmul %87, %88, %cst_34 {dimension_numbers = #tpu.dot_dimension_numbers<[1], [0], [0], [1], [0, 0, 1, 1], [], []>} : vector<8x8xbf16>, vector<8x8xbf16>, vector<8x8xf32> -> vector<8x8xf32>
    %90 = arith.truncf %89 : vector<8x8xf32> to vector<8x8xbf16>
    %c0_35 = arith.constant 0 : index
    %c8 = arith.constant 8 : index
    %91 = vector.load %arg11[%c0_35, %c8] : memref<8x32xbf16, #tpu.memory_space<vmem>>, vector<8x8xbf16>
    tpu.vector_store %arg11[%c0_35, %c8], %90 {strides = array<i32>} : memref<8x32xbf16, #tpu.memory_space<vmem>>, vector<8x8xbf16>,
    %92 = vector.extract_strided_slice %31 {offsets = [0, 16], sizes = [8, 8], strides = [1, 1]} : vector<8x96xf32> to vector<8x8xf32>
    %cst_36 = arith.constant 0.353553385 : f32
    %93 = vector.broadcast %cst_36 : f32 to vector<8x8xf32>
    %94 = arith.mulf %92, %93 : vector<8x8xf32>
    %95 = vector.extract_strided_slice %31 {offsets = [0, 48], sizes = [8, 8], strides = [1, 1]} : vector<8x96xf32> to vector<8x8xf32>
    %96 = vector.extract_strided_slice %31 {offsets = [0, 80], sizes = [8, 8], strides = [1, 1]} : vector<8x96xf32> to vector<8x8xf32>
    %97 = arith.truncf %94 : vector<8x8xf32> to vector<8x8xbf16>
    %98 = arith.truncf %95 : vector<8x8xf32> to vector<8x8xbf16>
    %cst_37 = arith.constant dense<0.000000e+00> : vector<8x8xf32>
    %99 = tpu.matmul %97, %98, %cst_37 {dimension_numbers = #tpu.dot_dimension_numbers<[1], [1], [0], [0], [0, 0, 1, 0], [], []>} : vector<8x8xbf16>, vector<8x8xbf16>, vector<8x8xf32> -> vector<8x8xf32>
    %100 = arith.addf %99, %43 : vector<8x8xf32>
    %cst_38 = arith.constant dense<0xFF800000> : vector<8xf32>
    %101 = vector.multi_reduction <maximumf>, %100, %cst_38 [1] : vector<8x8xf32> to vector<8xf32>
    %102 = vector.shape_cast %101 : vector<8xf32> to vector<8x1xf32>
    %103 = vector.broadcast %102 : vector<8x1xf32> to vector<8x8xf32>
    %104 = arith.subf %100, %103 : vector<8x8xf32>
    %105 = math.exp %104 : vector<8x8xf32>
    %cst_39 = arith.constant dense<0.000000e+00> : vector<8xf32>
    %106 = vector.multi_reduction <add>, %105, %cst_39 [1] : vector<8x8xf32> to vector<8xf32>
    %107 = vector.shape_cast %106 : vector<8xf32> to vector<8x1xf32>
    %108 = tpu.reciprocal %107 {approx = true} : vector<8x1xf32> -> vector<8x1xf32>
    %109 = vector.broadcast %108 : vector<8x1xf32> to vector<8x8xf32>
    %110 = arith.mulf %105, %109 : vector<8x8xf32>
    %111 = arith.truncf %110 : vector<8x8xf32> to vector<8x8xbf16>
    %112 = arith.truncf %96 : vector<8x8xf32> to vector<8x8xbf16>
    %cst_40 = arith.constant dense<0.000000e+00> : vector<8x8xf32>
    %113 = tpu.matmul %111, %112, %cst_40 {dimension_numbers = #tpu.dot_dimension_numbers<[1], [0], [0], [1], [0, 0, 1, 1], [], []>} : vector<8x8xbf16>, vector<8x8xbf16>, vector<8x8xf32> -> vector<8x8xf32>
    %114 = arith.truncf %113 : vector<8x8xf32> to vector<8x8xbf16>
    %c0_41 = arith.constant 0 : index
    %c16 = arith.constant 16 : index
    %115 = vector.load %arg11[%c0_41, %c16] : memref<8x32xbf16, #tpu.memory_space<vmem>>, vector<8x8xbf16>
    tpu.vector_store %arg11[%c0_41, %c16], %114 {strides = array<i32>} : memref<8x32xbf16, #tpu.memory_space<vmem>>, vector<8x8xbf16>,
    %116 = vector.extract_strided_slice %31 {offsets = [0, 24], sizes = [8, 8], strides = [1, 1]} : vector<8x96xf32> to vector<8x8xf32>
    %cst_42 = arith.constant 0.353553385 : f32
    %117 = vector.broadcast %cst_42 : f32 to vector<8x8xf32>
    %118 = arith.mulf %116, %117 : vector<8x8xf32>
    %119 = vector.extract_strided_slice %31 {offsets = [0, 56], sizes = [8, 8], strides = [1, 1]} : vector<8x96xf32> to vector<8x8xf32>
    %120 = vector.extract_strided_slice %31 {offsets = [0, 88], sizes = [8, 8], strides = [1, 1]} : vector<8x96xf32> to vector<8x8xf32>
    %121 = arith.truncf %118 : vector<8x8xf32> to vector<8x8xbf16>
    %122 = arith.truncf %119 : vector<8x8xf32> to vector<8x8xbf16>
    %cst_43 = arith.constant dense<0.000000e+00> : vector<8x8xf32>
    %123 = tpu.matmul %121, %122, %cst_43 {dimension_numbers = #tpu.dot_dimension_numbers<[1], [1], [0], [0], [0, 0, 1, 0], [], []>} : vector<8x8xbf16>, vector<8x8xbf16>, vector<8x8xf32> -> vector<8x8xf32>
    %124 = arith.addf %123, %43 : vector<8x8xf32>
    %cst_44 = arith.constant dense<0xFF800000> : vector<8xf32>
    %125 = vector.multi_reduction <maximumf>, %124, %cst_44 [1] : vector<8x8xf32> to vector<8xf32>
    %126 = vector.shape_cast %125 : vector<8xf32> to vector<8x1xf32>
    %127 = vector.broadcast %126 : vector<8x1xf32> to vector<8x8xf32>
    %128 = arith.subf %124, %127 : vector<8x8xf32>
    %129 = math.exp %128 : vector<8x8xf32>
    %cst_45 = arith.constant dense<0.000000e+00> : vector<8xf32>
    %130 = vector.multi_reduction <add>, %129, %cst_45 [1] : vector<8x8xf32> to vector<8xf32>
    %131 = vector.shape_cast %130 : vector<8xf32> to vector<8x1xf32>
    %132 = tpu.reciprocal %131 {approx = true} : vector<8x1xf32> -> vector<8x1xf32>
    %133 = vector.broadcast %132 : vector<8x1xf32> to vector<8x8xf32>
    %134 = arith.mulf %129, %133 : vector<8x8xf32>
    %135 = arith.truncf %134 : vector<8x8xf32> to vector<8x8xbf16>
    %136 = arith.truncf %120 : vector<8x8xf32> to vector<8x8xbf16>
    %cst_46 = arith.constant dense<0.000000e+00> : vector<8x8xf32>
    %137 = tpu.matmul %135, %136, %cst_46 {dimension_numbers = #tpu.dot_dimension_numbers<[1], [0], [0], [1], [0, 0, 1, 1], [], []>} : vector<8x8xbf16>, vector<8x8xbf16>, vector<8x8xf32> -> vector<8x8xf32>
    %138 = arith.truncf %137 : vector<8x8xf32> to vector<8x8xbf16>
    %c0_47 = arith.constant 0 : index
    %c24 = arith.constant 24 : index
    %139 = vector.load %arg11[%c0_47, %c24] : memref<8x32xbf16, #tpu.memory_space<vmem>>, vector<8x8xbf16>
    tpu.vector_store %arg11[%c0_47, %c24], %138 {strides = array<i32>} : memref<8x32xbf16, #tpu.memory_space<vmem>>, vector<8x8xbf16>,
    %c0_48 = arith.constant 0 : index
    %c0_49 = arith.constant 0 : index
    %140 = vector.load %arg11[%c0_48, %c0_49] : memref<8x32xbf16, #tpu.memory_space<vmem>>, vector<8x32xbf16>
    %c0_50 = arith.constant 0 : index
    %c0_51 = arith.constant 0 : index
    %141 = vector.load %arg8[%c0_50, %c0_51] : memref<32x32xbf16, #tpu.memory_space<vmem>>, vector<32x32xbf16>
    %cst_52 = arith.constant dense<0.000000e+00> : vector<8x32xf32>
    %142 = tpu.matmul %140, %141, %cst_52 {dimension_numbers = #tpu.dot_dimension_numbers<[1], [0], [0], [1], [0, 0, 1, 1], [], []>} : vector<8x32xbf16>, vector<32x32xbf16>, vector<8x32xf32> -> vector<8x32xf32>
    %c0_53 = arith.constant 0 : index
    %c0_54 = arith.constant 0 : index
    %c0_55 = arith.constant 0 : index
    %143 = vector.load %arg1[%c0_53, %c0_54, %c0_55] : memref<1x8x32xf32, #tpu.memory_space<vmem>>, vector<1x8x32xf32>
    %144 = vector.shape_cast %143 : vector<1x8x32xf32> to vector<8x32xf32>
    %145 = arith.addf %144, %142 : vector<8x32xf32>
    %c0_56 = arith.constant 0 : index
    %c0_57 = arith.constant 0 : index
    %146 = vector.load %arg9[%c0_56, %c0_57] : memref<1x32xf32, #tpu.memory_space<vmem>>, vector<1x32xf32>
    %147 = vector.broadcast %146 : vector<1x32xf32> to vector<8x32xf32>
    %148 = arith.addf %145, %147 : vector<8x32xf32>
    %c0_58 = arith.constant 0 : index
    %c0_59 = arith.constant 0 : index
    %c0_60 = arith.constant 0 : index
    %149 = vector.load %arg10[%c0_58, %c0_59, %c0_60] : memref<1x8x32xf32, #tpu.memory_space<vmem>>, vector<1x8x32xf32>
    %150 = vector.shape_cast %149 : vector<1x8x32xf32> to vector<8x32xf32>
    %151 = vector.shape_cast %148 : vector<8x32xf32> to vector<1x8x32xf32>
    tpu.vector_store %arg10[%c0_58, %c0_59, %c0_60], %151 {strides = array<i32>} : memref<1x8x32xf32, #tpu.memory_space<vmem>>, vector<1x8x32xf32>,
    return
  }
  func.func @transform_0(%arg0: i32) -> (i32, i32, i32) {
    %c0_i32 = arith.constant 0 : i32
    %c0_i32_0 = arith.constant 0 : i32
    %c0_i32_1 = arith.constant 0 : i32
    return %arg0, %c0_i32, %c0_i32_0 : i32, i32, i32
  }
  func.func @transform_1(%arg0: i32) -> (i32, i32) {
    %c0_i32 = arith.constant 0 : i32
    %c0_i32_0 = arith.constant 0 : i32
    %c0_i32_1 = arith.constant 0 : i32
    return %c0_i32, %c0_i32_0 : i32, i32
  }
  func.func @transform_2(%arg0: i32) -> (i32, i32) {
    %c0_i32 = arith.constant 0 : i32
    %c0_i32_0 = arith.constant 0 : i32
    %c0_i32_1 = arith.constant 0 : i32
    return %c0_i32, %c0_i32_0 : i32, i32
  }
  func.func @transform_3(%arg0: i32) -> (i32, i32) {
    %c0_i32 = arith.constant 0 : i32
    %c0_i32_0 = arith.constant 0 : i32
    %c0_i32_1 = arith.constant 0 : i32
    return %c0_i32, %c0_i32_0 : i32, i32
  }
  func.func @transform_4(%arg0: i32) -> (i32, i32) {
    %c0_i32 = arith.constant 0 : i32
    %c0_i32_0 = arith.constant 0 : i32
    %c0_i32_1 = arith.constant 0 : i32
    return %c0_i32, %c0_i32_0 : i32, i32
  }
  func.func @transform_5(%arg0: i32) -> (i32, i32, i32) {
    %c0_i32 = arith.constant 0 : i32
    %c0_i32_0 = arith.constant 0 : i32
    %c0_i32_1 = arith.constant 0 : i32
    return %arg0, %c0_i32, %c0_i32_0 : i32, i32, i32
  }
  func.func @transform_6(%arg0: i32) -> (i32, i32) {
    %c0_i32 = arith.constant 0 : i32
    %c0_i32_0 = arith.constant 0 : i32
    %c0_i32_1 = arith.constant 0 : i32
    return %c0_i32, %c0_i32_0 : i32, i32
  }
  func.func @transform_7(%arg0: i32) -> (i32, i32) {
    %c0_i32 = arith.constant 0 : i32
    %c0_i32_0 = arith.constant 0 : i32
    %c0_i32_1 = arith.constant 0 : i32
    return %c0_i32, %c0_i32_0 : i32, i32
  }
  func.func @transform_8(%arg0: i32) -> (i32, i32) {
    %c0_i32 = arith.constant 0 : i32
    %c0_i32_0 = arith.constant 0 : i32
    %c0_i32_1 = arith.constant 0 : i32
    return %c0_i32, %c0_i32_0 : i32, i32
  }
  func.func @transform_9(%arg0: i32) -> (i32, i32, i32) {
    %c0_i32 = arith.constant 0 : i32
    %c0_i32_0 = arith.constant 0 : i32
    %c0_i32_1 = arith.constant 0 : i32
    return %arg0, %c0_i32, %c0_i32_0 : i32, i32, i32
  }
}

</mosaic_0001>

<llo_original>
// kernel: tpu_custom_call.1
$region0: #{tpu_custom_call.1}
  #allocation0 [shape = 'u32[]', space=smem, size = 0x4, offset = 0x4, fixed_abs, tag = 'smem constant byte address 0x4 - core index']
  #allocation1 [shape = 'u32[144,128]{1,0:T(1,128)}', space=vmem, size = 0x12000, scoped, tag = 'internal scratch']
  #allocation2 [shape = 'bf16[8,32]{1,0:T(8,128)(2,1)}', space=vmem, size = 0x800, scoped, tag = 'scratch operand']
  %s0 = inlined_call_operand.hbm [shape: f32[2,8,32], index: 0, kind: input, shape index: {}]
  %s1 = inlined_call_operand.hbm [shape: f32[1,32], index: 1, kind: input, shape index: {}]
  %s2 = inlined_call_operand.hbm [shape: f32[1,32], index: 2, kind: input, shape index: {}]
  %s3 = inlined_call_operand.hbm [shape: bf16[32,96], index: 3, kind: input, shape index: {}]
  %s4 = inlined_call_operand.hbm [shape: f32[1,96], index: 4, kind: input, shape index: {}]
  %s5 = inlined_call_operand.hbm [shape: s32[2,1,8], index: 5, kind: input, shape index: {}]
  %s6 = inlined_call_operand.hbm [shape: s32[8,8], index: 6, kind: input, shape index: {}]
  %s7 = inlined_call_operand.hbm [shape: bf16[32,32], index: 7, kind: input, shape index: {}]
  %s8 = inlined_call_operand.hbm [shape: f32[1,32], index: 8, kind: input, shape index: {}]
  %s9 = inlined_call_operand.hbm [shape: f32[2,8,32], index: 9, kind: output, shape index: {}]
  %s10 = sld [smem:[#allocation0]]
  $region105: #{tpu_custom_call.1} parent=0
    _
  %s12 = ssub.s32 1, %s10
  %s13 = scalar_select 0, %s12, %s10
  $region1: #{tpu_custom_call.1} parent=0
    #allocation3 [shape = 'u8[8192]{0}', space=vmem, size = 0x2000, scoped, tag = 'input window, operand 0']
    #allocation4 [shape = 's32[2]{0}', space=sflag, size = 0x8, scoped, tag = 'scoped memory for tpu_custom_call.1']
    #allocation5 [shape = 's32[2]{0}', space=sflag, size = 0x8, scoped, tag = 'scoped memory for tpu_custom_call.1']
    #allocation6 [shape = 'u8[512]{0}', space=vmem, size = 0x400, scoped, tag = 'input window, operand 1, single buffered']
    #allocation7 [shape = 's32[1]{0}', space=sflag, size = 0x4, scoped, tag = 'scoped memory for tpu_custom_call.1']
    #allocation8 [shape = 'u8[512]{0}', space=vmem, size = 0x400, scoped, tag = 'input window, operand 2, single buffered']
    #allocation9 [shape = 'u8[8192]{0}', space=vmem, size = 0x2000, scoped, tag = 'input window, operand 3, single buffered']
    #allocation10 [shape = 's32[1]{0}', space=sflag, size = 0x4, scoped, tag = 'scoped memory for tpu_custom_call.1']
    #allocation11 [shape = 'u8[512]{0}', space=vmem, size = 0x400, scoped, tag = 'input window, operand 4, single buffered']
    #allocation12 [shape = 'u8[1024]{0}', space=vmem, size = 0x400, scoped, tag = 'input window, operand 5']
    #allocation13 [shape = 's32[2]{0}', space=sflag, size = 0x8, scoped, tag = 'scoped memory for tpu_custom_call.1']
    #allocation14 [shape = 'u8[4096]{0}', space=vmem, size = 0x1000, scoped, tag = 'input window, operand 6, single buffered']
    #allocation15 [shape = 'u8[8192]{0}', space=vmem, size = 0x2000, scoped, tag = 'input window, operand 7, single buffered']
    #allocation16 [shape = 's32[1]{0}', space=sflag, size = 0x4, scoped, tag = 'scoped memory for tpu_custom_call.1']
    #allocation17 [shape = 'u8[512]{0}', space=vmem, size = 0x400, scoped, tag = 'input window, operand 8, single buffered']
    #allocation18 [shape = 'u8[8192]{0}', space=vmem, size = 0x2000, scoped, tag = 'output window, operand 0']
    %14 = vsyncpa [#allocation4], 0
    %s15 = scalar_lea.sflag [#allocation4], 1
    %16 = vsyncpa %s15, 0
    %17 = vsyncpa [#allocation7], 0
    %18 = vsyncpa [#allocation10], 0
    %19 = vsyncpa [#allocation13], 0
    %s20 = scalar_lea.sflag [#allocation13], 1
    %21 = vsyncpa %s20, 0
    %22 = vsyncpa [#allocation16], 0
    %23 = vsyncpa [#allocation5], 0
    %s24 = scalar_lea.sflag [#allocation5], 1
    %25 = vsyncpa %s24, 0
    loop: start=0, step=1, limit=4
    $region2: #{tpu_custom_call.1} parent=1 // loop_pre_header
      _
    $region3: #{tpu_custom_call.1} parent=1 // loop_header
      %s27 = sphi 0, %s31
      %p28 = scmp.ge.s32.totalorder %s27, 4
      %s37 = sphi 0, %s39
      %s40 = sphi 0, %s37
      %s41 = sphi 0, %s40
      %s57 = sphi 0, %s41
      %s61 = sphi 0, %s61
      %s63 = sphi 0, %s61
      %s64 = sphi 0, %s63
      %s78 = sphi 0, %s64
      %s82 = sphi 0, %s82
      %s84 = sphi 0, %s82
      %s85 = sphi 0, %s84
      %s99 = sphi 0, %s85
      %s103 = sphi 0, %s103
      %s105 = sphi 0, %s103
      %s106 = sphi 0, %s105
      %s120 = sphi 0, %s106
      %s124 = sphi 0, %s124
      %s126 = sphi 0, %s124
      %s127 = sphi 0, %s126
      %s141 = sphi 0, %s127
      %s147 = sphi 0, %s149
      %s150 = sphi 0, %s147
      %s151 = sphi 0, %s150
      %s167 = sphi 0, %s151
      %s171 = sphi 0, %s171
      %s173 = sphi 0, %s171
      %s174 = sphi 0, %s173
      %s188 = sphi 0, %s174
      %s192 = sphi 0, %s192
      %s194 = sphi 0, %s192
      %s195 = sphi 0, %s194
      %s209 = sphi 0, %s195
      %s213 = sphi 0, %s213
      %s215 = sphi 0, %s213
      %s216 = sphi 0, %s215
      %s230 = sphi 0, %s216
      %s236 = sphi 0, %s238
      %s239 = sphi 0, %s236
      %s240 = sphi 0, %s239
      %s256 = sphi 0, %s240
    $region4: #{tpu_custom_call.1} parent=1 // loop_header_branch
      %30 = sbr.rel (%p28) target = $region8
    $region5: #{tpu_custom_call.1} parent=1 // loop_body
      %s32 = ssub.s32 %s27, 1
      %s33 = ssub.s32 %s27, 2
      %s34 = sadd.s32 %s27, 1
      %s35 = ssub.s32 %s27, %s34
      %p36 = scmp.eq.s32.totalorder %s35, 0
      %s38 = sadd.s32 %s37, 1
      %s39 = scalar_select %p36, %s37, %s38
      %p42 = pneg %p36
      %p43 = scmp.eq.s32.totalorder %s27, 1
      %p44 = por %p42, %p43
      %p45 = scmp.ne.s32.totalorder %s37, %s40
      %p46 = scmp.eq.s32.totalorder %s27, 0
      %p47 = por %p45, %p46
      %p48 = scmp.ne.s32.totalorder %s37, %s40
      %p49 = scmp.eq.s32.totalorder %s32, 1
      %p50 = por %p48, %p49
      %p51 = scmp.ne.s32.totalorder %s40, %s41
      %p52 = scmp.eq.s32.totalorder %s32, 0
      %p53 = por %p51, %p52
      %p54 = scmp.ne.s32.totalorder %s40, %s41
      %p55 = scmp.eq.s32.totalorder %s33, 1
      %p56 = por %p54, %p55
      %p58 = scmp.ne.s32.totalorder %s41, %s57
      %p59 = scmp.eq.s32.totalorder %s33, 0
      %p60 = por %p58, %p59
      %s62 = sadd.s32 %s61, 1
      %p65 = scmp.eq.s32.totalorder %s27, 1
      %p66 = scmp.ne.s32.totalorder %s61, %s63
      %p67 = scmp.eq.s32.totalorder %s27, 0
      %p68 = por %p66, %p67
      %p69 = scmp.ne.s32.totalorder %s61, %s63
      %p70 = scmp.eq.s32.totalorder %s32, 1
      %p71 = por %p69, %p70
      %p72 = scmp.ne.s32.totalorder %s63, %s64
      %p73 = scmp.eq.s32.totalorder %s32, 0
      %p74 = por %p72, %p73
      %p75 = scmp.ne.s32.totalorder %s63, %s64
      %p76 = scmp.eq.s32.totalorder %s33, 1
      %p77 = por %p75, %p76
      %p79 = scmp.ne.s32.totalorder %s64, %s78
      %p80 = scmp.eq.s32.totalorder %s33, 0
      %p81 = por %p79, %p80
      %s83 = sadd.s32 %s82, 1
      %p86 = scmp.eq.s32.totalorder %s27, 1
      %p87 = scmp.ne.s32.totalorder %s82, %s84
      %p88 = scmp.eq.s32.totalorder %s27, 0
      %p89 = por %p87, %p88
      %p90 = scmp.ne.s32.totalorder %s82, %s84
      %p91 = scmp.eq.s32.totalorder %s32, 1
      %p92 = por %p90, %p91
      %p93 = scmp.ne.s32.totalorder %s84, %s85
      %p94 = scmp.eq.s32.totalorder %s32, 0
      %p95 = por %p93, %p94
      %p96 = scmp.ne.s32.totalorder %s84, %s85
      %p97 = scmp.eq.s32.totalorder %s33, 1
      %p98 = por %p96, %p97
      %p100 = scmp.ne.s32.totalorder %s85, %s99
      %p101 = scmp.eq.s32.totalorder %s33, 0
      %p102 = por %p100, %p101
      %s104 = sadd.s32 %s103, 1
      %p107 = scmp.eq.s32.totalorder %s27, 1
      %p108 = scmp.ne.s32.totalorder %s103, %s105
      %p109 = scmp.eq.s32.totalorder %s27, 0
      %p110 = por %p108, %p109
      %p111 = scmp.ne.s32.totalorder %s103, %s105
      %p112 = scmp.eq.s32.totalorder %s32, 1
      %p113 = por %p111, %p112
      %p114 = scmp.ne.s32.totalorder %s105, %s106
      %p115 = scmp.eq.s32.totalorder %s32, 0
      %p116 = por %p114, %p115
      %p117 = scmp.ne.s32.totalorder %s105, %s106
      %p118 = scmp.eq.s32.totalorder %s33, 1
      %p119 = por %p117, %p118
      %p121 = scmp.ne.s32.totalorder %s106, %s120
      %p122 = scmp.eq.s32.totalorder %s33, 0
      %p123 = por %p121, %p122
      %s125 = sadd.s32 %s124, 1
      %p128 = scmp.eq.s32.totalorder %s27, 1
      %p129 = scmp.ne.s32.totalorder %s124, %s126
      %p130 = scmp.eq.s32.totalorder %s27, 0
      %p131 = por %p129, %p130
      %p132 = scmp.ne.s32.totalorder %s124, %s126
      %p133 = scmp.eq.s32.totalorder %s32, 1
      %p134 = por %p132, %p133
      %p135 = scmp.ne.s32.totalorder %s126, %s127
      %p136 = scmp.eq.s32.totalorder %s32, 0
      %p137 = por %p135, %p136
      %p138 = scmp.ne.s32.totalorder %s126, %s127
      %p139 = scmp.eq.s32.totalorder %s33, 1
      %p140 = por %p138, %p139
      %p142 = scmp.ne.s32.totalorder %s127, %s141
      %p143 = scmp.eq.s32.totalorder %s33, 0
      %p144 = por %p142, %p143
      %s145 = ssub.s32 %s27, %s34
      %p146 = scmp.eq.s32.totalorder %s145, 0
      %s148 = sadd.s32 %s147, 1
      %s149 = scalar_select %p146, %s147, %s148
      %p152 = pneg %p146
      %p153 = scmp.eq.s32.totalorder %s27, 1
      %p154 = por %p152, %p153
      %p155 = scmp.ne.s32.totalorder %s147, %s150
      %p156 = scmp.eq.s32.totalorder %s27, 0
      %p157 = por %p155, %p156
      %p158 = scmp.ne.s32.totalorder %s147, %s150
      %p159 = scmp.eq.s32.totalorder %s32, 1
      %p160 = por %p158, %p159
      %p161 = scmp.ne.s32.totalorder %s150, %s151
      %p162 = scmp.eq.s32.totalorder %s32, 0
      %p163 = por %p161, %p162
      %p164 = scmp.ne.s32.totalorder %s150, %s151
      %p165 = scmp.eq.s32.totalorder %s33, 1
      %p166 = por %p164, %p165
      %p168 = scmp.ne.s32.totalorder %s151, %s167
      %p169 = scmp.eq.s32.totalorder %s33, 0
      %p170 = por %p168, %p169
      %s172 = sadd.s32 %s171, 1
      %p175 = scmp.eq.s32.totalorder %s27, 1
      %p176 = scmp.ne.s32.totalorder %s171, %s173
      %p177 = scmp.eq.s32.totalorder %s27, 0
      %p178 = por %p176, %p177
      %p179 = scmp.ne.s32.totalorder %s171, %s173
      %p180 = scmp.eq.s32.totalorder %s32, 1
      %p181 = por %p179, %p180
      %p182 = scmp.ne.s32.totalorder %s173, %s174
      %p183 = scmp.eq.s32.totalorder %s32, 0
      %p184 = por %p182, %p183
      %p185 = scmp.ne.s32.totalorder %s173, %s174
      %p186 = scmp.eq.s32.totalorder %s33, 1
      %p187 = por %p185, %p186
      %p189 = scmp.ne.s32.totalorder %s174, %s188
      %p190 = scmp.eq.s32.totalorder %s33, 0
      %p191 = por %p189, %p190
      %s193 = sadd.s32 %s192, 1
      %p196 = scmp.eq.s32.totalorder %s27, 1
      %p197 = scmp.ne.s32.totalorder %s192, %s194
      %p198 = scmp.eq.s32.totalorder %s27, 0
      %p199 = por %p197, %p198
      %p200 = scmp.ne.s32.totalorder %s192, %s194
      %p201 = scmp.eq.s32.totalorder %s32, 1
      %p202 = por %p200, %p201
      %p203 = scmp.ne.s32.totalorder %s194, %s195
      %p204 = scmp.eq.s32.totalorder %s32, 0
      %p205 = por %p203, %p204
      %p206 = scmp.ne.s32.totalorder %s194, %s195
      %p207 = scmp.eq.s32.totalorder %s33, 1
      %p208 = por %p206, %p207
      %p210 = scmp.ne.s32.totalorder %s195, %s209
      %p211 = scmp.eq.s32.totalorder %s33, 0
      %p212 = por %p210, %p211
      %s214 = sadd.s32 %s213, 1
      %p217 = scmp.eq.s32.totalorder %s27, 1
      %p218 = scmp.ne.s32.totalorder %s213, %s215
      %p219 = scmp.eq.s32.totalorder %s27, 0
      %p220 = por %p218, %p219
      %p221 = scmp.ne.s32.totalorder %s213, %s215
      %p222 = scmp.eq.s32.totalorder %s32, 1
      %p223 = por %p221, %p222
      %p224 = scmp.ne.s32.totalorder %s215, %s216
      %p225 = scmp.eq.s32.totalorder %s32, 0
      %p226 = por %p224, %p225
      %p227 = scmp.ne.s32.totalorder %s215, %s216
      %p228 = scmp.eq.s32.totalorder %s33, 1
      %p229 = por %p227, %p228
      %p231 = scmp.ne.s32.totalorder %s216, %s230
      %p232 = scmp.eq.s32.totalorder %s33, 0
      %p233 = por %p231, %p232
      %s234 = ssub.s32 %s27, %s34
      %p235 = scmp.eq.s32.totalorder %s234, 0
      %s237 = sadd.s32 %s236, 1
      %s238 = scalar_select %p235, %s236, %s237
      %p241 = pneg %p235
      %p242 = scmp.eq.s32.totalorder %s27, 1
      %p243 = por %p241, %p242
      %p244 = scmp.ne.s32.totalorder %s236, %s239
      %p245 = scmp.eq.s32.totalorder %s27, 0
      %p246 = por %p244, %p245
      %p247 = scmp.ne.s32.totalorder %s236, %s239
      %p248 = scmp.eq.s32.totalorder %s32, 1
      %p249 = por %p247, %p248
      %p250 = scmp.ne.s32.totalorder %s239, %s240
      %p251 = scmp.eq.s32.totalorder %s32, 0
      %p252 = por %p250, %p251
      %p253 = scmp.ne.s32.totalorder %s239, %s240
      %p254 = scmp.eq.s32.totalorder %s33, 1
      %p255 = por %p253, %p254
      %p257 = scmp.ne.s32.totalorder %s240, %s256
      %p258 = scmp.eq.s32.totalorder %s33, 0
      %p259 = por %p257, %p258
      %p260 = scmp.le.s32.totalorder 1, %s27
      %p261 = scmp.lt.s32.totalorder %s27, 3
      %p262 = pnand %p260, %p261
      %p263 = pneg %p262
      // Predicated region
      $region9: #{tpu_custom_call.1} parent=5 // pred_check
        _
      $region10: #{tpu_custom_call.1} parent=5 // pred_check_branch
        %265 = sbr.rel (%p262) target = $region12
      $region11: #{tpu_custom_call.1} parent=5 // pred_region
        %s266 = ssub.s32 %s27, 1
        // Predicated region
        $region13: #{tpu_custom_call.1} parent=11 // pred_check
          %p267 = pneg %p74
        $region14: #{tpu_custom_call.1} parent=11 // pred_check_branch
          %269 = sbr.rel (%p267) target = $region16
        $region15: #{tpu_custom_call.1} parent=11 // pred_region
          %s271 = ssub.s32 16, 16
          %272 = vsyncadd [#allocation7], %s271
          %s274 = sshll.u32 [#allocation6], 4
          %s275 = int_to_ptr.vmem [resolvable:$true] %s274
          %277 = dma.hbm_to_vmem [thread:$0]  %s1, 16, %s275, [#allocation7]
        $region16: #{tpu_custom_call.1} parent=11 // pred_fallthru
          _
        // Predicated region
        $region17: #{tpu_custom_call.1} parent=11 // pred_check
          %p278 = pneg %p95
        $region18: #{tpu_custom_call.1} parent=11 // pred_check_branch
          %280 = sbr.rel (%p278) target = $region20
        $region19: #{tpu_custom_call.1} parent=11 // pred_region
          %s282 = ssub.s32 16, 16
          %283 = vsyncadd [#allocation7], %s282
          %s285 = sshll.u32 [#allocation8], 4
          %s286 = int_to_ptr.vmem [resolvable:$true] %s285
          %288 = dma.hbm_to_vmem [thread:$0]  %s2, 16, %s286, [#allocation7]
        $region20: #{tpu_custom_call.1} parent=11 // pred_fallthru
          _
        // Predicated region
        $region21: #{tpu_custom_call.1} parent=11 // pred_check
          %p289 = pneg %p116
        $region22: #{tpu_custom_call.1} parent=11 // pred_check_branch
          %291 = sbr.rel (%p289) target = $region24
        $region23: #{tpu_custom_call.1} parent=11 // pred_region
          %s293 = ssub.s32 256, 256
          %294 = vsyncadd [#allocation10], %s293
          %s295 = sshll.u32 [#allocation9], 4
          %s296 = int_to_ptr.vmem [resolvable:$true] %s295
          %301 = dma.hbm_to_vmem [thread:$0]  %s3, 256, %s296, [#allocation10], 64, 64, 4
        $region24: #{tpu_custom_call.1} parent=11 // pred_fallthru
          _
        // Predicated region
        $region25: #{tpu_custom_call.1} parent=11 // pred_check
          %p302 = pneg %p137
        $region26: #{tpu_custom_call.1} parent=11 // pred_check_branch
          %304 = sbr.rel (%p302) target = $region28
        $region27: #{tpu_custom_call.1} parent=11 // pred_region
          %s306 = ssub.s32 16, 16
          %307 = vsyncadd [#allocation10], %s306
          %s309 = sshll.u32 [#allocation11], 4
          %s310 = int_to_ptr.vmem [resolvable:$true] %s309
          %312 = dma.hbm_to_vmem [thread:$0]  %s4, 16, %s310, [#allocation10]
        $region28: #{tpu_custom_call.1} parent=11 // pred_fallthru
          _
        // Predicated region
        $region29: #{tpu_custom_call.1} parent=11 // pred_check
          %p313 = pneg %p184
        $region30: #{tpu_custom_call.1} parent=11 // pred_check_branch
          %315 = sbr.rel (%p313) target = $region32
        $region31: #{tpu_custom_call.1} parent=11 // pred_region
          %s317 = ssub.s32 128, 128
          %318 = vsyncadd [#allocation13], %s317
          %s320 = sshll.u32 [#allocation14], 4
          %s321 = int_to_ptr.vmem [resolvable:$true] %s320
          %323 = dma.hbm_to_vmem [thread:$0]  %s6, 128, %s321, [#allocation13]
        $region32: #{tpu_custom_call.1} parent=11 // pred_fallthru
          _
        // Predicated region
        $region33: #{tpu_custom_call.1} parent=11 // pred_check
          %p324 = pneg %p205
        $region34: #{tpu_custom_call.1} parent=11 // pred_check_branch
          %326 = sbr.rel (%p324) target = $region36
        $region35: #{tpu_custom_call.1} parent=11 // pred_region
          %s328 = ssub.s32 256, 256
          %329 = vsyncadd [#allocation16], %s328
          %s330 = sshll.u32 [#allocation15], 4
          %s331 = int_to_ptr.vmem [resolvable:$true] %s330
          %336 = dma.hbm_to_vmem [thread:$0]  %s7, 256, %s331, [#allocation16], 64, 64, 4
        $region36: #{tpu_custom_call.1} parent=11 // pred_fallthru
          _
        // Predicated region
        $region37: #{tpu_custom_call.1} parent=11 // pred_check
          %p337 = pneg %p226
        $region38: #{tpu_custom_call.1} parent=11 // pred_check_branch
          %339 = sbr.rel (%p337) target = $region40
        $region39: #{tpu_custom_call.1} parent=11 // pred_region
          %s341 = ssub.s32 16, 16
          %342 = vsyncadd [#allocation16], %s341
          %s344 = sshll.u32 [#allocation17], 4
          %s345 = int_to_ptr.vmem [resolvable:$true] %s344
          %347 = dma.hbm_to_vmem [thread:$0]  %s8, 16, %s345, [#allocation16]
        $region40: #{tpu_custom_call.1} parent=11 // pred_fallthru
          _
      $region12: #{tpu_custom_call.1} parent=5 // pred_fallthru
        _
      %p348 = scmp.lt.s32.totalorder %s27, 2
      // Predicated region
      $region41: #{tpu_custom_call.1} parent=5 // pred_check
        %p349 = pneg %p348
      $region42: #{tpu_custom_call.1} parent=5 // pred_check_branch
        %351 = sbr.rel (%p349) target = $region44
      $region43: #{tpu_custom_call.1} parent=5 // pred_region
        // Predicated region
        $region45: #{tpu_custom_call.1} parent=43 // pred_check
          %p352 = pneg %p47
        $region46: #{tpu_custom_call.1} parent=43 // pred_check_branch
          %354 = sbr.rel (%p352) target = $region48
        $region47: #{tpu_custom_call.1} parent=43 // pred_region
          %s355 = sand.u32 %s37, 1
          %s356 = scalar_lea.sflag [#allocation4], %s355
          %s357 = sand.u32 %s37, 1
          %s358 = smul.addr %s357, 8
          %s359 = scalar_lea.vmem [#allocation3], %s358
          %s361 = ssub.s32 128, 128
          %362 = vsyncadd %s356, %s361
          %s363 = smul.addr %s27, 128
          %s364 = scalar_lea.hbm %s0, %s363
          %s366 = sshll.u32 %s359, 4
          %s367 = int_to_ptr.vmem [resolvable:$true] %s366
          %369 = dma.hbm_to_vmem [thread:$0]  %s364, 128, %s367, %s356
        $region48: #{tpu_custom_call.1} parent=43 // pred_fallthru
          _
        // Predicated region
        $region49: #{tpu_custom_call.1} parent=43 // pred_check
          %p370 = pneg %p157
        $region50: #{tpu_custom_call.1} parent=43 // pred_check_branch
          %372 = sbr.rel (%p370) target = $region52
        $region51: #{tpu_custom_call.1} parent=43 // pred_region
          %s373 = sand.u32 %s27, 1
          %s374 = scalar_lea.sflag [#allocation13], %s373
          %s375 = sand.u32 %s147, 1
          %s376 = scalar_lea.vmem [#allocation12], %s375
          %s378 = ssub.s32 16, 16
          %379 = vsyncadd %s374, %s378
          %s380 = smul.addr %s27, 16
          %s381 = scalar_lea.hbm %s5, %s380
          %s383 = sshll.u32 %s376, 4
          %s384 = int_to_ptr.vmem [resolvable:$true] %s383
          %386 = dma.hbm_to_vmem [thread:$0]  %s381, 16, %s384, %s374
        $region52: #{tpu_custom_call.1} parent=43 // pred_fallthru
          _
      $region44: #{tpu_custom_call.1} parent=5 // pred_fallthru
        _
      %p387 = scmp.le.s32.totalorder 1, %s27
      %p388 = scmp.lt.s32.totalorder %s27, 3
      %p389 = pnand %p387, %p388
      %p390 = pneg %p389
      // Predicated region
      $region53: #{tpu_custom_call.1} parent=5 // pred_check
        _
      $region54: #{tpu_custom_call.1} parent=5 // pred_check_branch
        %392 = sbr.rel (%p389) target = $region56
      $region55: #{tpu_custom_call.1} parent=5 // pred_region
        %s393 = ssub.s32 %s27, 1
        %s394 = sand.u32 %s40, 1
        %s395 = scalar_lea.sflag [#allocation4], %s394
        %s396 = sand.u32 %s40, 1
        %s397 = smul.addr %s396, 8
        %s398 = scalar_lea.vmem [#allocation3], %s397
        // Predicated region
        $region57: #{tpu_custom_call.1} parent=55 // pred_check
          %p399 = pneg %p53
        $region58: #{tpu_custom_call.1} parent=55 // pred_check_branch
          %401 = sbr.rel (%p399) target = $region60
        $region59: #{tpu_custom_call.1} parent=55 // pred_region
          %402 = dma.done %s395, 128
        $region60: #{tpu_custom_call.1} parent=55 // pred_fallthru
          _
        // Predicated region
        $region61: #{tpu_custom_call.1} parent=55 // pred_check
          %p403 = pneg %p74
        $region62: #{tpu_custom_call.1} parent=55 // pred_check_branch
          %405 = sbr.rel (%p403) target = $region64
        $region63: #{tpu_custom_call.1} parent=55 // pred_region
          %406 = dma.done [#allocation7], 16
        $region64: #{tpu_custom_call.1} parent=55 // pred_fallthru
          _
        // Predicated region
        $region65: #{tpu_custom_call.1} parent=55 // pred_check
          %p407 = pneg %p95
        $region66: #{tpu_custom_call.1} parent=55 // pred_check_branch
          %409 = sbr.rel (%p407) target = $region68
        $region67: #{tpu_custom_call.1} parent=55 // pred_region
          %410 = dma.done [#allocation7], 16
        $region68: #{tpu_custom_call.1} parent=55 // pred_fallthru
          _
        // Predicated region
        $region69: #{tpu_custom_call.1} parent=55 // pred_check
          %p411 = pneg %p116
        $region70: #{tpu_custom_call.1} parent=55 // pred_check_branch
          %413 = sbr.rel (%p411) target = $region72
        $region71: #{tpu_custom_call.1} parent=55 // pred_region
          %414 = dma.done [#allocation10], 256
        $region72: #{tpu_custom_call.1} parent=55 // pred_fallthru
          _
        // Predicated region
        $region73: #{tpu_custom_call.1} parent=55 // pred_check
          %p415 = pneg %p137
        $region74: #{tpu_custom_call.1} parent=55 // pred_check_branch
          %417 = sbr.rel (%p415) target = $region76
        $region75: #{tpu_custom_call.1} parent=55 // pred_region
          %418 = dma.done [#allocation10], 16
        $region76: #{tpu_custom_call.1} parent=55 // pred_fallthru
          _
        %s419 = sand.u32 %s32, 1
        %s420 = scalar_lea.sflag [#allocation13], %s419
        %s421 = sand.u32 %s150, 1
        %s422 = scalar_lea.vmem [#allocation12], %s421
        // Predicated region
        $region77: #{tpu_custom_call.1} parent=55 // pred_check
          %p423 = pneg %p163
        $region78: #{tpu_custom_call.1} parent=55 // pred_check_branch
          %425 = sbr.rel (%p423) target = $region80
        $region79: #{tpu_custom_call.1} parent=55 // pred_region
          %426 = dma.done %s420, 16
        $region80: #{tpu_custom_call.1} parent=55 // pred_fallthru
          _
        // Predicated region
        $region81: #{tpu_custom_call.1} parent=55 // pred_check
          %p427 = pneg %p184
        $region82: #{tpu_custom_call.1} parent=55 // pred_check_branch
          %429 = sbr.rel (%p427) target = $region84
        $region83: #{tpu_custom_call.1} parent=55 // pred_region
          %430 = dma.done [#allocation13], 128
        $region84: #{tpu_custom_call.1} parent=55 // pred_fallthru
          _
        // Predicated region
        $region85: #{tpu_custom_call.1} parent=55 // pred_check
          %p431 = pneg %p205
        $region86: #{tpu_custom_call.1} parent=55 // pred_check_branch
          %433 = sbr.rel (%p431) target = $region88
        $region87: #{tpu_custom_call.1} parent=55 // pred_region
          %434 = dma.done [#allocation16], 256
        $region88: #{tpu_custom_call.1} parent=55 // pred_fallthru
          _
        // Predicated region
        $region89: #{tpu_custom_call.1} parent=55 // pred_check
          %p435 = pneg %p226
        $region90: #{tpu_custom_call.1} parent=55 // pred_check_branch
          %437 = sbr.rel (%p435) target = $region92
        $region91: #{tpu_custom_call.1} parent=55 // pred_region
          %438 = dma.done [#allocation16], 16
        $region92: #{tpu_custom_call.1} parent=55 // pred_fallthru
          _
        %s439 = sand.u32 %s40, 1
        %s440 = scalar_lea.sflag [#allocation4], %s439
        %s441 = sand.u32 %s40, 1
        %s442 = smul.addr %s441, 8
        %s443 = scalar_lea.vmem [#allocation3], %s442
        %p444 = pneg %p53
        %p445 = pneg %p50
        %p446 = pneg %p74
        %p447 = pneg %p71
        %p448 = pneg %p95
        %p449 = pneg %p92
        %p450 = pneg %p116
        %p451 = pneg %p113
        %p452 = pneg %p137
        %p453 = pneg %p134
        %s454 = sand.u32 %s32, 1
        %s455 = scalar_lea.sflag [#allocation13], %s454
        %s456 = sand.u32 %s150, 1
        %s457 = scalar_lea.vmem [#allocation12], %s456
        %p458 = pneg %p163
        %p459 = pneg %p160
        %p460 = pneg %p184
        %p461 = pneg %p181
        %p462 = pneg %p205
        %p463 = pneg %p202
        %p464 = pneg %p226
        %p465 = pneg %p223
        %p466 = pneg %p252
        %p467 = pneg %p249
        %s468 = sand.u32 %s239, 1
        %s469 = scalar_lea.sflag [#allocation5], %s468
        %s470 = sand.u32 %s239, 1
        %s471 = smul.addr %s470, 8
        %s472 = scalar_lea.vmem [#allocation18], %s471
        %v474 = vld [vmem:[%s398] sm:$0xff]
        %v475 = vld [vmem:[#allocation6] sm:$0x1]
        %v476 = vld [vmem:[#allocation8] sm:$0x1]
        %vm477 = vcmask 261120
        %v478 = vsel %vm477, %v474, 0.0
        %479 = vadd.xlane.f32.xlu0 %v478
        %v480 = vpop.xlane.xlu0 %479
        %v481 = vrcp.pop 32.0
        %v482 = vmul.f32 %v480, %v481
        %v483 = vsub.f32 %v474, %v482
        %v484 = vmul.f32 %v483, %v483
        %v485 = vsel %vm477, %v484, 0.0
        %486 = vadd.xlane.f32.xlu0 %v485
        %v487 = vpop.xlane.xlu0 %486
        %v488 = vmul.f32 %v487, %v481
        %v489 = vadd.f32 %v488, 1e-05
        %v490 = vrsqrt.pop %v489
        %v491 = vmul.f32 %v483, %v490
        %v493 = vlaneseq
        %v494 = vshrl.u32 %v493, 7
        %v495 = vsub.s32 0, %v494
        %v496 = vrot.slane %v475, %v495
        %v498 = vmul.f32 %v491, %v496
        %v500 = vlaneseq
        %v501 = vshrl.u32 %v500, 7
        %v502 = vsub.s32 0, %v501
        %v503 = vrot.slane %v476, %v502
        %v505 = vadd.f32 %v498, %v503
        %v506 = vpack.c.bf16 %v505, %v505
        %v507 = vld [vmem:[#allocation9] sm:$0xf]
        %v508 = vld [vmem:[#allocation9 + $0x4] sm:$0xf]
        %v509 = vld [vmem:[#allocation9 + $0x8] sm:$0xf]
        %v510 = vld [vmem:[#allocation9 + $0xc] sm:$0xf]
        %v511 = vld [vmem:[#allocation11] sm:$0x1]
        %v513 = vlaneseq
        %v514 = vshrl.u32 %v513, 7
        %v515 = vsub.s32 0, %v514
        %v516 = vrot.slane %v511, %v515
        %v522 = vunpack.c.l.b16 %v507
        %v523 = vunpack.c.l.b16 %v508
        %v524 = vunpack.c.l.b16 %v509
        %v525 = vunpack.c.l.b16 %v510
        %v526 = vpack.c.b16 %v523, %v522
        %v527 = vpack.c.b16 %v525, %v524
        %v531 = vsel %vm477, %v506, 0
        %533 = vmatprep.subr.bf16.mxu0 0
        %534 = vmatpush1.bf16.msra.mxu0 %v526
        %535 = vmatprep.subr.bf16.mxu0 0
        %536 = vmatpush1.bf16.msra.mxu0 %v527
        %537 = vmatprep.subr.bf16.mxu0 0
        %538 = vmatpush1.bf16.msra.mxu0 0
        %539 = vmatprep.subr.bf16.mxu0 0
        %540 = vmatpush1.bf16.msra.mxu0 0
        %541 = vmatprep.subr.bf16.mxu0 0
        %542 = vmatpush1.bf16.msra.mxu0 0
        %543 = vmatprep.subr.bf16.mxu0 0
        %544 = vmatpush1.bf16.msra.mxu0 0
        %545 = vmatprep.subr.bf16.mxu0 0
        %546 = vmatpush1.bf16.msra.mxu0 0
        %547 = vmatprep.subr.bf16.mxu0 0
        %548 = vmatpush1.bf16.msra.mxu0 0
        %549 = vmatprep.subr.bf16.mxu0 0
        %550 = vmatpush1.bf16.msra.mxu0 0
        %551 = vmatprep.subr.bf16.mxu0 0
        %552 = vmatpush1.bf16.msra.mxu0 0
        %553 = vmatprep.subr.bf16.mxu0 0
        %554 = vmatpush1.bf16.msra.mxu0 0
        %555 = vmatprep.subr.bf16.mxu0 0
        %556 = vmatpush1.bf16.msra.mxu0 0
        %557 = vmatprep.subr.bf16.mxu0 0
        %558 = vmatpush1.bf16.msra.mxu0 0
        %559 = vmatprep.subr.bf16.mxu0 0
        %560 = vmatpush1.bf16.msra.mxu0 0
        %561 = vmatprep.subr.bf16.mxu0 0
        %562 = vmatpush1.bf16.msra.mxu0 0
        %563 = vmatprep.subr.bf16.mxu0 0
        %564 = vmatpush1.bf16.msra.mxu0 0
        %565 = vmatprep.mubr.bf16.mxu0 0
        %566 = vmatmul.mubr.bf16.gmra.mrb[0].mxu0 %v531
        %v567 = vpop.f32.mrb[0].mxu0
        %v568 = vadd.f32 %v516, %v567
        %v569 = vpop.f32.mrb[0].mxu0
        %v570 = vpop.f32.mrb[0].mxu0
        %v571 = vpop.f32.mrb[0].mxu0
        %572 = vdwg.mxu0
        %v573 = vld [vmem:[%s422] sm:$0x1]
        %vm574 = vcmp.ne.s32.totalorder %v573, 0
        %v575 = vld [vmem:[#allocation14] sm:$0xff]
        %vm576 = vcmp.ne.s32.totalorder %v575, 0
        %v577 = vsel %vm574, 1, 0
        %v578 = vlaneseq
        %v579 = vshrl.u32 %v578, 7
        %v580 = vsub.s32 0, %v579
        %v581 = vrot.slane %v577, %v580
        %vm582 = vcmp.eq.s32.totalorder %v581, 1
        %vm583 = vmand %vm582, %vm576
        %v584 = vsel %vm583, 0.0, -1e+09
        %v585 = vmul.f32 %v568, 0.35355338
        %v586 = vpack.c.bf16 %v585, %v585
        %v587 = vpack.c.bf16 %v568, %v568
        %589 = vrot.lane.b32.xlu0 %v587, 96
        %v590 = vpop.permute.xlu0 %589
        %vm591 = vcmask 64512
        %v593 = vsel %vm591, %v586, 0
        %v596 = vsel %vm591, %v590, 0
        %598 = vmatprep.subr.bf16.mxu0 0
        %599 = vmatpush1.bf16.xpose.msra.mxu0 %v596
        %600 = vmatprep.subr.bf16.mxu0 0
        %601 = vmatpush1.bf16.xpose.msra.mxu0 0
        %602 = vmatprep.subr.bf16.mxu0 0
        %603 = vmatpush1.bf16.xpose.msra.mxu0 0
        %604 = vmatprep.subr.bf16.mxu0 0
        %605 = vmatpush1.bf16.xpose.msra.mxu0 0
        %606 = vmatprep.subr.bf16.mxu0 0
        %607 = vmatpush1.bf16.xpose.msra.mxu0 0
        %608 = vmatprep.subr.bf16.mxu0 0
        %609 = vmatpush1.bf16.xpose.msra.mxu0 0
        %610 = vmatprep.subr.bf16.mxu0 0
        %611 = vmatpush1.bf16.xpose.msra.mxu0 0
        %612 = vmatprep.subr.bf16.mxu0 0
        %613 = vmatpush1.bf16.xpose.msra.mxu0 0
        %614 = vmatprep.subr.bf16.mxu0 0
        %615 = vmatpush1.bf16.xpose.msra.mxu0 0
        %616 = vmatprep.subr.bf16.mxu0 0
        %617 = vmatpush1.bf16.xpose.msra.mxu0 0
        %618 = vmatprep.subr.bf16.mxu0 0
        %619 = vmatpush1.bf16.xpose.msra.mxu0 0
        %620 = vmatprep.subr.bf16.mxu0 0
        %621 = vmatpush1.bf16.xpose.msra.mxu0 0
        %622 = vmatprep.subr.bf16.mxu0 0
        %623 = vmatpush1.bf16.xpose.msra.mxu0 0
        %624 = vmatprep.subr.bf16.mxu0 0
        %625 = vmatpush1.bf16.xpose.msra.mxu0 0
        %626 = vmatprep.subr.bf16.mxu0 0
        %627 = vmatpush1.bf16.xpose.msra.mxu0 0
        %628 = vmatprep.subr.bf16.mxu0 0
        %629 = vmatpush1.bf16.xpose.msra.mxu0 0
        %630 = vmatprep.mubr.bf16.mxu0 0
        %631 = vmatmul.mubr.bf16.gmra.mrb[0].mxu0 %v593
        %v632 = vpop.f32.mrb[0].mxu0
        %v633 = vadd.f32 %v584, %v632
        %v634 = vpop.f32.mrb[0].mxu0
        %v635 = vpop.f32.mrb[0].mxu0
        %v636 = vpop.f32.mrb[0].mxu0
        %637 = vdwg.mxu0
        %v638 = vsel %vm591, %v633, -inf
        %639 = vmax.xlane.f32.xlu0 %v638
        %v640 = vpop.xlane.xlu0 %639
        %v641 = vsub.f32 %v633, %v640
        %v642 = vmul.f32 %v641, 1.442695
        %v643 = vpow.pop %v642
        %v644 = vsel %vm591, %v643, 0.0
        %645 = vadd.xlane.f32.xlu0 %v644
        %v646 = vpop.xlane.xlu0 %645
        %v647 = vrcp.pop %v646
        %v648 = vmul.f32 %v643, %v647
        %v649 = vpack.c.bf16 %v648, %v648
        %650 = vrot.lane.b32.xlu0 %v587, 64
        %v651 = vpop.permute.xlu0 %650
        %v653 = vsel %vm591, %v649, 0
        %vm655 = vcmask 1043456
        %v657 = vsel %vm655, %v651, 0
        %659 = vmatprep.subr.bf16.mxu0 0
        %660 = vmatpush1.bf16.msra.mxu0 %v657
        %661 = vmatprep.subr.bf16.mxu0 0
        %662 = vmatpush1.bf16.msra.mxu0 0
        %663 = vmatprep.subr.bf16.mxu0 0
        %664 = vmatpush1.bf16.msra.mxu0 0
        %665 = vmatprep.subr.bf16.mxu0 0
        %666 = vmatpush1.bf16.msra.mxu0 0
        %667 = vmatprep.subr.bf16.mxu0 0
        %668 = vmatpush1.bf16.msra.mxu0 0
        %669 = vmatprep.subr.bf16.mxu0 0
        %670 = vmatpush1.bf16.msra.mxu0 0
        %671 = vmatprep.subr.bf16.mxu0 0
        %672 = vmatpush1.bf16.msra.mxu0 0
        %673 = vmatprep.subr.bf16.mxu0 0
        %674 = vmatpush1.bf16.msra.mxu0 0
        %675 = vmatprep.subr.bf16.mxu0 0
        %676 = vmatpush1.bf16.msra.mxu0 0
        %677 = vmatprep.subr.bf16.mxu0 0
        %678 = vmatpush1.bf16.msra.mxu0 0
        %679 = vmatprep.subr.bf16.mxu0 0
        %680 = vmatpush1.bf16.msra.mxu0 0
        %681 = vmatprep.subr.bf16.mxu0 0
        %682 = vmatpush1.bf16.msra.mxu0 0
        %683 = vmatprep.subr.bf16.mxu0 0
        %684 = vmatpush1.bf16.msra.mxu0 0
        %685 = vmatprep.subr.bf16.mxu0 0
        %686 = vmatpush1.bf16.msra.mxu0 0
        %687 = vmatprep.subr.bf16.mxu0 0
        %688 = vmatpush1.bf16.msra.mxu0 0
        %689 = vmatprep.subr.bf16.mxu0 0
        %690 = vmatpush1.bf16.msra.mxu0 0
        %691 = vmatprep.mubr.bf16.mxu0 0
        %692 = vmatmul.mubr.bf16.gmra.mrb[0].mxu0 %v653
        %v693 = vpop.f32.mrb[0].mxu0
        %v694 = vadd.f32 0.0, %v693
        %v695 = vpop.f32.mrb[0].mxu0
        %v696 = vpop.f32.mrb[0].mxu0
        %v697 = vpop.f32.mrb[0].mxu0
        %698 = vdwg.mxu0
        %v699 = vpack.c.bf16 %v694, %v694
        %vm700 = vcmask 60416
        %701 = vst.msk [vmem:[#allocation2] sm:$0xf] %vm700, %v699
        %703 = vrot.lane.b32.xlu0 %v586, 120
        %v704 = vpop.permute.xlu0 %703
        %705 = vrot.lane.b32.xlu0 %v587, 88
        %v706 = vpop.permute.xlu0 %705
        %v708 = vsel %vm591, %v704, 0
        %v711 = vsel %vm591, %v706, 0
        %713 = vmatprep.subr.bf16.mxu0 0
        %714 = vmatpush1.bf16.xpose.msra.mxu0 %v711
        %715 = vmatprep.subr.bf16.mxu0 0
        %716 = vmatpush1.bf16.xpose.msra.mxu0 0
        %717 = vmatprep.subr.bf16.mxu0 0
        %718 = vmatpush1.bf16.xpose.msra.mxu0 0
        %719 = vmatprep.subr.bf16.mxu0 0
        %720 = vmatpush1.bf16.xpose.msra.mxu0 0
        %721 = vmatprep.subr.bf16.mxu0 0
        %722 = vmatpush1.bf16.xpose.msra.mxu0 0
        %723 = vmatprep.subr.bf16.mxu0 0
        %724 = vmatpush1.bf16.xpose.msra.mxu0 0
        %725 = vmatprep.subr.bf16.mxu0 0
        %726 = vmatpush1.bf16.xpose.msra.mxu0 0
        %727 = vmatprep.subr.bf16.mxu0 0
        %728 = vmatpush1.bf16.xpose.msra.mxu0 0
        %729 = vmatprep.subr.bf16.mxu0 0
        %730 = vmatpush1.bf16.xpose.msra.mxu0 0
        %731 = vmatprep.subr.bf16.mxu0 0
        %732 = vmatpush1.bf16.xpose.msra.mxu0 0
        %733 = vmatprep.subr.bf16.mxu0 0
        %734 = vmatpush1.bf16.xpose.msra.mxu0 0
        %735 = vmatprep.subr.bf16.mxu0 0
        %736 = vmatpush1.bf16.xpose.msra.mxu0 0
        %737 = vmatprep.subr.bf16.mxu0 0
        %738 = vmatpush1.bf16.xpose.msra.mxu0 0
        %739 = vmatprep.subr.bf16.mxu0 0
        %740 = vmatpush1.bf16.xpose.msra.mxu0 0
        %741 = vmatprep.subr.bf16.mxu0 0
        %742 = vmatpush1.bf16.xpose.msra.mxu0 0
        %743 = vmatprep.subr.bf16.mxu0 0
        %744 = vmatpush1.bf16.xpose.msra.mxu0 0
        %745 = vmatprep.mubr.bf16.mxu0 0
        %746 = vmatmul.mubr.bf16.gmra.mrb[0].mxu0 %v708
        %v747 = vpop.f32.mrb[0].mxu0
        %v748 = vadd.f32 %v584, %v747
        %v749 = vpop.f32.mrb[0].mxu0
        %v750 = vpop.f32.mrb[0].mxu0
        %v751 = vpop.f32.mrb[0].mxu0
        %752 = vdwg.mxu0
        %v753 = vsel %vm591, %v748, -inf
        %754 = vmax.xlane.f32.xlu0 %v753
        %v755 = vpop.xlane.xlu0 %754
        %v756 = vsub.f32 %v748, %v755
        %v757 = vmul.f32 %v756, 1.442695
        %v758 = vpow.pop %v757
        %v759 = vsel %vm591, %v758, 0.0
        %760 = vadd.xlane.f32.xlu0 %v759
        %v761 = vpop.xlane.xlu0 %760
        %v762 = vrcp.pop %v761
        %v763 = vmul.f32 %v758, %v762
        %v764 = vpack.c.bf16 %v763, %v763
        %765 = vrot.lane.b32.xlu0 %v587, 56
        %v766 = vpop.permute.xlu0 %765
        %v768 = vsel %vm591, %v764, 0
        %v771 = vsel %vm655, %v766, 0
        %773 = vmatprep.subr.bf16.mxu0 0
        %774 = vmatpush1.bf16.msra.mxu0 %v771
        %775 = vmatprep.subr.bf16.mxu0 0
        %776 = vmatpush1.bf16.msra.mxu0 0
        %777 = vmatprep.subr.bf16.mxu0 0
        %778 = vmatpush1.bf16.msra.mxu0 0
        %779 = vmatprep.subr.bf16.mxu0 0
        %780 = vmatpush1.bf16.msra.mxu0 0
        %781 = vmatprep.subr.bf16.mxu0 0
        %782 = vmatpush1.bf16.msra.mxu0 0
        %783 = vmatprep.subr.bf16.mxu0 0
        %784 = vmatpush1.bf16.msra.mxu0 0
        %785 = vmatprep.subr.bf16.mxu0 0
        %786 = vmatpush1.bf16.msra.mxu0 0
        %787 = vmatprep.subr.bf16.mxu0 0
        %788 = vmatpush1.bf16.msra.mxu0 0
        %789 = vmatprep.subr.bf16.mxu0 0
        %790 = vmatpush1.bf16.msra.mxu0 0
        %791 = vmatprep.subr.bf16.mxu0 0
        %792 = vmatpush1.bf16.msra.mxu0 0
        %793 = vmatprep.subr.bf16.mxu0 0
        %794 = vmatpush1.bf16.msra.mxu0 0
        %795 = vmatprep.subr.bf16.mxu0 0
        %796 = vmatpush1.bf16.msra.mxu0 0
        %797 = vmatprep.subr.bf16.mxu0 0
        %798 = vmatpush1.bf16.msra.mxu0 0
        %799 = vmatprep.subr.bf16.mxu0 0
        %800 = vmatpush1.bf16.msra.mxu0 0
        %801 = vmatprep.subr.bf16.mxu0 0
        %802 = vmatpush1.bf16.msra.mxu0 0
        %803 = vmatprep.subr.bf16.mxu0 0
        %804 = vmatpush1.bf16.msra.mxu0 0
        %805 = vmatprep.mubr.bf16.mxu0 0
        %806 = vmatmul.mubr.bf16.gmra.mrb[0].mxu0 %v768
        %v807 = vpop.f32.mrb[0].mxu0
        %v808 = vadd.f32 0.0, %v807
        %v809 = vpop.f32.mrb[0].mxu0
        %v810 = vpop.f32.mrb[0].mxu0
        %v811 = vpop.f32.mrb[0].mxu0
        %812 = vdwg.mxu0
        %v813 = vpack.c.bf16 %v808, %v808
        %v815 = vunpack.c.l.b16 %v813
        %v816 = vpack.c.b16 %v815, %v815
        %817 = vrot.lane.b32.xlu0 %v816, 8
        %v818 = vpop.permute.xlu0 %817
        %vm820 = vcmask 126016
        %821 = vst.msk [vmem:[#allocation2] sm:$0xf] %vm820, %v818
        %822 = vrot.lane.b32.xlu0 %v586, 112
        %v823 = vpop.permute.xlu0 %822
        %824 = vrot.lane.b32.xlu0 %v587, 80
        %v825 = vpop.permute.xlu0 %824
        %v827 = vsel %vm591, %v823, 0
        %v830 = vsel %vm591, %v825, 0
        %832 = vmatprep.subr.bf16.mxu0 0
        %833 = vmatpush1.bf16.xpose.msra.mxu0 %v830
        %834 = vmatprep.subr.bf16.mxu0 0
        %835 = vmatpush1.bf16.xpose.msra.mxu0 0
        %836 = vmatprep.subr.bf16.mxu0 0
        %837 = vmatpush1.bf16.xpose.msra.mxu0 0
        %838 = vmatprep.subr.bf16.mxu0 0
        %839 = vmatpush1.bf16.xpose.msra.mxu0 0
        %840 = vmatprep.subr.bf16.mxu0 0
        %841 = vmatpush1.bf16.xpose.msra.mxu0 0
        %842 = vmatprep.subr.bf16.mxu0 0
        %843 = vmatpush1.bf16.xpose.msra.mxu0 0
        %844 = vmatprep.subr.bf16.mxu0 0
        %845 = vmatpush1.bf16.xpose.msra.mxu0 0
        %846 = vmatprep.subr.bf16.mxu0 0
        %847 = vmatpush1.bf16.xpose.msra.mxu0 0
        %848 = vmatprep.subr.bf16.mxu0 0
        %849 = vmatpush1.bf16.xpose.msra.mxu0 0
        %850 = vmatprep.subr.bf16.mxu0 0
        %851 = vmatpush1.bf16.xpose.msra.mxu0 0
        %852 = vmatprep.subr.bf16.mxu0 0
        %853 = vmatpush1.bf16.xpose.msra.mxu0 0
        %854 = vmatprep.subr.bf16.mxu0 0
        %855 = vmatpush1.bf16.xpose.msra.mxu0 0
        %856 = vmatprep.subr.bf16.mxu0 0
        %857 = vmatpush1.bf16.xpose.msra.mxu0 0
        %858 = vmatprep.subr.bf16.mxu0 0
        %859 = vmatpush1.bf16.xpose.msra.mxu0 0
        %860 = vmatprep.subr.bf16.mxu0 0
        %861 = vmatpush1.bf16.xpose.msra.mxu0 0
        %862 = vmatprep.subr.bf16.mxu0 0
        %863 = vmatpush1.bf16.xpose.msra.mxu0 0
        %864 = vmatprep.mubr.bf16.mxu0 0
        %865 = vmatmul.mubr.bf16.gmra.mrb[0].mxu0 %v827
        %v866 = vpop.f32.mrb[0].mxu0
        %v867 = vadd.f32 %v584, %v866
        %v868 = vpop.f32.mrb[0].mxu0
        %v869 = vpop.f32.mrb[0].mxu0
        %v870 = vpop.f32.mrb[0].mxu0
        %871 = vdwg.mxu0
        %v872 = vsel %vm591, %v867, -inf
        %873 = vmax.xlane.f32.xlu0 %v872
        %v874 = vpop.xlane.xlu0 %873
        %v875 = vsub.f32 %v867, %v874
        %v876 = vmul.f32 %v875, 1.442695
        %v877 = vpow.pop %v876
        %v878 = vsel %vm591, %v877, 0.0
        %879 = vadd.xlane.f32.xlu0 %v878
        %v880 = vpop.xlane.xlu0 %879
        %v881 = vrcp.pop %v880
        %v882 = vmul.f32 %v877, %v881
        %v883 = vpack.c.bf16 %v882, %v882
        %884 = vrot.lane.b32.xlu0 %v587, 48
        %v885 = vpop.permute.xlu0 %884
        %v887 = vsel %vm591, %v883, 0
        %v890 = vsel %vm655, %v885, 0
        %892 = vmatprep.subr.bf16.mxu0 0
        %893 = vmatpush1.bf16.msra.mxu0 %v890
        %894 = vmatprep.subr.bf16.mxu0 0
        %895 = vmatpush1.bf16.msra.mxu0 0
        %896 = vmatprep.subr.bf16.mxu0 0
        %897 = vmatpush1.bf16.msra.mxu0 0
        %898 = vmatprep.subr.bf16.mxu0 0
        %899 = vmatpush1.bf16.msra.mxu0 0
        %900 = vmatprep.subr.bf16.mxu0 0
        %901 = vmatpush1.bf16.msra.mxu0 0
        %902 = vmatprep.subr.bf16.mxu0 0
        %903 = vmatpush1.bf16.msra.mxu0 0
        %904 = vmatprep.subr.bf16.mxu0 0
        %905 = vmatpush1.bf16.msra.mxu0 0
        %906 = vmatprep.subr.bf16.mxu0 0
        %907 = vmatpush1.bf16.msra.mxu0 0
        %908 = vmatprep.subr.bf16.mxu0 0
        %909 = vmatpush1.bf16.msra.mxu0 0
        %910 = vmatprep.subr.bf16.mxu0 0
        %911 = vmatpush1.bf16.msra.mxu0 0
        %912 = vmatprep.subr.bf16.mxu0 0
        %913 = vmatpush1.bf16.msra.mxu0 0
        %914 = vmatprep.subr.bf16.mxu0 0
        %915 = vmatpush1.bf16.msra.mxu0 0
        %916 = vmatprep.subr.bf16.mxu0 0
        %917 = vmatpush1.bf16.msra.mxu0 0
        %918 = vmatprep.subr.bf16.mxu0 0
        %919 = vmatpush1.bf16.msra.mxu0 0
        %920 = vmatprep.subr.bf16.mxu0 0
        %921 = vmatpush1.bf16.msra.mxu0 0
        %922 = vmatprep.subr.bf16.mxu0 0
        %923 = vmatpush1.bf16.msra.mxu0 0
        %924 = vmatprep.mubr.bf16.mxu0 0
        %925 = vmatmul.mubr.bf16.gmra.mrb[0].mxu0 %v887
        %v926 = vpop.f32.mrb[0].mxu0
        %v927 = vadd.f32 0.0, %v926
        %v928 = vpop.f32.mrb[0].mxu0
        %v929 = vpop.f32.mrb[0].mxu0
        %v930 = vpop.f32.mrb[0].mxu0
        %931 = vdwg.mxu0
        %v932 = vpack.c.bf16 %v927, %v927
        %v934 = vunpack.c.l.b16 %v932
        %v935 = vpack.c.b16 %v934, %v934
        %936 = vrot.lane.b32.xlu0 %v935, 16
        %v937 = vpop.permute.xlu0 %936
        %vm939 = vcmask 191616
        %940 = vst.msk [vmem:[#allocation2] sm:$0xf] %vm939, %v937
        %941 = vrot.lane.b32.xlu0 %v586, 104
        %v942 = vpop.permute.xlu0 %941
        %943 = vrot.lane.b32.xlu0 %v587, 72
        %v944 = vpop.permute.xlu0 %943
        %v946 = vsel %vm591, %v942, 0
        %v949 = vsel %vm591, %v944, 0
        %951 = vmatprep.subr.bf16.mxu0 0
        %952 = vmatpush1.bf16.xpose.msra.mxu0 %v949
        %953 = vmatprep.subr.bf16.mxu0 0
        %954 = vmatpush1.bf16.xpose.msra.mxu0 0
        %955 = vmatprep.subr.bf16.mxu0 0
        %956 = vmatpush1.bf16.xpose.msra.mxu0 0
        %957 = vmatprep.subr.bf16.mxu0 0
        %958 = vmatpush1.bf16.xpose.msra.mxu0 0
        %959 = vmatprep.subr.bf16.mxu0 0
        %960 = vmatpush1.bf16.xpose.msra.mxu0 0
        %961 = vmatprep.subr.bf16.mxu0 0
        %962 = vmatpush1.bf16.xpose.msra.mxu0 0
        %963 = vmatprep.subr.bf16.mxu0 0
        %964 = vmatpush1.bf16.xpose.msra.mxu0 0
        %965 = vmatprep.subr.bf16.mxu0 0
        %966 = vmatpush1.bf16.xpose.msra.mxu0 0
        %967 = vmatprep.subr.bf16.mxu0 0
        %968 = vmatpush1.bf16.xpose.msra.mxu0 0
        %969 = vmatprep.subr.bf16.mxu0 0
        %970 = vmatpush1.bf16.xpose.msra.mxu0 0
        %971 = vmatprep.subr.bf16.mxu0 0
        %972 = vmatpush1.bf16.xpose.msra.mxu0 0
        %973 = vmatprep.subr.bf16.mxu0 0
        %974 = vmatpush1.bf16.xpose.msra.mxu0 0
        %975 = vmatprep.subr.bf16.mxu0 0
        %976 = vmatpush1.bf16.xpose.msra.mxu0 0
        %977 = vmatprep.subr.bf16.mxu0 0
        %978 = vmatpush1.bf16.xpose.msra.mxu0 0
        %979 = vmatprep.subr.bf16.mxu0 0
        %980 = vmatpush1.bf16.xpose.msra.mxu0 0
        %981 = vmatprep.subr.bf16.mxu0 0
        %982 = vmatpush1.bf16.xpose.msra.mxu0 0
        %983 = vmatprep.mubr.bf16.mxu0 0
        %984 = vmatmul.mubr.bf16.gmra.mrb[0].mxu0 %v946
        %v985 = vpop.f32.mrb[0].mxu0
        %v986 = vadd.f32 %v584, %v985
        %v987 = vpop.f32.mrb[0].mxu0
        %v988 = vpop.f32.mrb[0].mxu0
        %v989 = vpop.f32.mrb[0].mxu0
        %990 = vdwg.mxu0
        %v991 = vsel %vm591, %v986, -inf
        %992 = vmax.xlane.f32.xlu0 %v991
        %v993 = vpop.xlane.xlu0 %992
        %v994 = vsub.f32 %v986, %v993
        %v995 = vmul.f32 %v994, 1.442695
        %v996 = vpow.pop %v995
        %v997 = vsel %vm591, %v996, 0.0
        %998 = vadd.xlane.f32.xlu0 %v997
        %v999 = vpop.xlane.xlu0 %998
        %v1000 = vrcp.pop %v999
        %v1001 = vmul.f32 %v996, %v1000
        %v1002 = vpack.c.bf16 %v1001, %v1001
        %1003 = vrot.lane.b32.xlu0 %v587, 40
        %v1004 = vpop.permute.xlu0 %1003
        %v1006 = vsel %vm591, %v1002, 0
        %v1009 = vsel %vm655, %v1004, 0
        %1011 = vmatprep.subr.bf16.mxu0 0
        %1012 = vmatpush1.bf16.msra.mxu0 %v1009
        %1013 = vmatprep.subr.bf16.mxu0 0
        %1014 = vmatpush1.bf16.msra.mxu0 0
        %1015 = vmatprep.subr.bf16.mxu0 0
        %1016 = vmatpush1.bf16.msra.mxu0 0
        %1017 = vmatprep.subr.bf16.mxu0 0
        %1018 = vmatpush1.bf16.msra.mxu0 0
        %1019 = vmatprep.subr.bf16.mxu0 0
        %1020 = vmatpush1.bf16.msra.mxu0 0
        %1021 = vmatprep.subr.bf16.mxu0 0
        %1022 = vmatpush1.bf16.msra.mxu0 0
        %1023 = vmatprep.subr.bf16.mxu0 0
        %1024 = vmatpush1.bf16.msra.mxu0 0
        %1025 = vmatprep.subr.bf16.mxu0 0
        %1026 = vmatpush1.bf16.msra.mxu0 0
        %1027 = vmatprep.subr.bf16.mxu0 0
        %1028 = vmatpush1.bf16.msra.mxu0 0
        %1029 = vmatprep.subr.bf16.mxu0 0
        %1030 = vmatpush1.bf16.msra.mxu0 0
        %1031 = vmatprep.subr.bf16.mxu0 0
        %1032 = vmatpush1.bf16.msra.mxu0 0
        %1033 = vmatprep.subr.bf16.mxu0 0
        %1034 = vmatpush1.bf16.msra.mxu0 0
        %1035 = vmatprep.subr.bf16.mxu0 0
        %1036 = vmatpush1.bf16.msra.mxu0 0
        %1037 = vmatprep.subr.bf16.mxu0 0
        %1038 = vmatpush1.bf16.msra.mxu0 0
        %1039 = vmatprep.subr.bf16.mxu0 0
        %1040 = vmatpush1.bf16.msra.mxu0 0
        %1041 = vmatprep.subr.bf16.mxu0 0
        %1042 = vmatpush1.bf16.msra.mxu0 0
        %1043 = vmatprep.mubr.bf16.mxu0 0
        %1044 = vmatmul.mubr.bf16.gmra.mrb[0].mxu0 %v1006
        %v1045 = vpop.f32.mrb[0].mxu0
        %v1046 = vadd.f32 0.0, %v1045
        %v1047 = vpop.f32.mrb[0].mxu0
        %v1048 = vpop.f32.mrb[0].mxu0
        %v1049 = vpop.f32.mrb[0].mxu0
        %1050 = vdwg.mxu0
        %v1051 = vpack.c.bf16 %v1046, %v1046
        %v1053 = vunpack.c.l.b16 %v1051
        %v1054 = vpack.c.b16 %v1053, %v1053
        %1055 = vrot.lane.b32.xlu0 %v1054, 24
        %v1056 = vpop.permute.xlu0 %1055
        %vm1058 = vcmask 257216
        %1059 = vst.msk [vmem:[#allocation2] sm:$0xf] %vm1058, %v1056
        %v1060 = vld [vmem:[#allocation2] sm:$0xf]
        %v1061 = vld [vmem:[#allocation15] sm:$0xf]
        %v1062 = vld [vmem:[#allocation15 + $0x4] sm:$0xf]
        %v1063 = vld [vmem:[#allocation15 + $0x8] sm:$0xf]
        %v1064 = vld [vmem:[#allocation15 + $0xc] sm:$0xf]
        %v1069 = vunpack.c.l.b16 %v1061
        %v1070 = vunpack.c.l.b16 %v1062
        %v1071 = vunpack.c.l.b16 %v1063
        %v1072 = vunpack.c.l.b16 %v1064
        %v1073 = vpack.c.b16 %v1070, %v1069
        %v1074 = vpack.c.b16 %v1072, %v1071
        %v1078 = vsel %vm477, %v1060, 0
        %1080 = vmatprep.subr.bf16.mxu0 0
        %1081 = vmatpush1.bf16.msra.mxu0 %v1073
        %1082 = vmatprep.subr.bf16.mxu0 0
        %1083 = vmatpush1.bf16.msra.mxu0 %v1074
        %1084 = vmatprep.subr.bf16.mxu0 0
        %1085 = vmatpush1.bf16.msra.mxu0 0
        %1086 = vmatprep.subr.bf16.mxu0 0
        %1087 = vmatpush1.bf16.msra.mxu0 0
        %1088 = vmatprep.subr.bf16.mxu0 0
        %1089 = vmatpush1.bf16.msra.mxu0 0
        %1090 = vmatprep.subr.bf16.mxu0 0
        %1091 = vmatpush1.bf16.msra.mxu0 0
        %1092 = vmatprep.subr.bf16.mxu0 0
        %1093 = vmatpush1.bf16.msra.mxu0 0
        %1094 = vmatprep.subr.bf16.mxu0 0
        %1095 = vmatpush1.bf16.msra.mxu0 0
        %1096 = vmatprep.subr.bf16.mxu0 0
        %1097 = vmatpush1.bf16.msra.mxu0 0
        %1098 = vmatprep.subr.bf16.mxu0 0
        %1099 = vmatpush1.bf16.msra.mxu0 0
        %1100 = vmatprep.subr.bf16.mxu0 0
        %1101 = vmatpush1.bf16.msra.mxu0 0
        %1102 = vmatprep.subr.bf16.mxu0 0
        %1103 = vmatpush1.bf16.msra.mxu0 0
        %1104 = vmatprep.subr.bf16.mxu0 0
        %1105 = vmatpush1.bf16.msra.mxu0 0
        %1106 = vmatprep.subr.bf16.mxu0 0
        %1107 = vmatpush1.bf16.msra.mxu0 0
        %1108 = vmatprep.subr.bf16.mxu0 0
        %1109 = vmatpush1.bf16.msra.mxu0 0
        %1110 = vmatprep.subr.bf16.mxu0 0
        %1111 = vmatpush1.bf16.msra.mxu0 0
        %1112 = vmatprep.mubr.bf16.mxu0 0
        %1113 = vmatmul.mubr.bf16.gmra.mrb[0].mxu0 %v1078
        %v1114 = vpop.f32.mrb[0].mxu0
        %v1115 = vadd.f32 0.0, %v1114
        %v1116 = vpop.f32.mrb[0].mxu0
        %v1117 = vpop.f32.mrb[0].mxu0
        %v1118 = vpop.f32.mrb[0].mxu0
        %1119 = vdwg.mxu0
        %v1120 = vld [vmem:[%s398] sm:$0xff]
        %v1121 = vadd.f32 %v1120, %v1115
        %v1122 = vld [vmem:[#allocation17] sm:$0x1]
        %v1124 = vlaneseq
        %v1125 = vshrl.u32 %v1124, 7
        %v1126 = vsub.s32 0, %v1125
        %v1127 = vrot.slane %v1122, %v1126
        %v1129 = vadd.f32 %v1121, %v1127
        %1130 = vst.msk [vmem:[%s472] sm:$0xff] %vm477, %v1129
        %s1131 = sand.u32 %s239, 1
        %s1132 = scalar_lea.sflag [#allocation5], %s1131
        %s1133 = sand.u32 %s239, 1
        %s1134 = smul.addr %s1133, 8
        %s1135 = scalar_lea.vmem [#allocation18], %s1134
        // Predicated region
        $region93: #{tpu_custom_call.1} parent=55 // pred_check
          %p1136 = pneg %p249
        $region94: #{tpu_custom_call.1} parent=55 // pred_check_branch
          %1138 = sbr.rel (%p1136) target = $region96
        $region95: #{tpu_custom_call.1} parent=55 // pred_region
          %s1140 = ssub.s32 128, 128
          %1141 = vsyncadd %s1132, %s1140
          %s1142 = smul.addr %s32, 128
          %s1143 = scalar_lea.hbm %s9, %s1142
          %s1145 = sshll.u32 %s1135, 4
          %s1146 = int_to_ptr.vmem [resolvable:$true] %s1145
          %1148 = dma.vmem_to_hbm [thread:$0]  %s1146, 128, %s1143, %s1132
        $region96: #{tpu_custom_call.1} parent=55 // pred_fallthru
          _
      $region56: #{tpu_custom_call.1} parent=5 // pred_fallthru
        _
      %p1149 = scmp.le.s32.totalorder 2, %s27
      // Predicated region
      $region97: #{tpu_custom_call.1} parent=5 // pred_check
        %p1150 = pneg %p1149
      $region98: #{tpu_custom_call.1} parent=5 // pred_check_branch
        %1152 = sbr.rel (%p1150) target = $region100
      $region99: #{tpu_custom_call.1} parent=5 // pred_region
        %s1153 = ssub.s32 %s27, 2
        // Predicated region
        $region101: #{tpu_custom_call.1} parent=99 // pred_check
          %p1154 = pneg %p255
        $region102: #{tpu_custom_call.1} parent=99 // pred_check_branch
          %1156 = sbr.rel (%p1154) target = $region104
        $region103: #{tpu_custom_call.1} parent=99 // pred_region
          %s1157 = sand.u32 %s240, 1
          %s1158 = scalar_lea.sflag [#allocation5], %s1157
          %s1159 = sand.u32 %s240, 1
          %s1160 = smul.addr %s1159, 8
          %s1161 = scalar_lea.vmem [#allocation18], %s1160
          %1162 = dma.done %s1158, 128
        $region104: #{tpu_custom_call.1} parent=99 // pred_fallthru
          _
      $region100: #{tpu_custom_call.1} parent=5 // pred_fallthru
        _
    $region6: #{tpu_custom_call.1} parent=1 // loop_footer
      %s31 = sadd.s32 1, %s27
    $region7: #{tpu_custom_call.1} parent=1 // loop_footer_branch
      %26 = sbr.rel target = $region3
    $region8: #{tpu_custom_call.1} parent=1 // loop_exit
      _
    %1163 = vsyncpa [#allocation4], 1
    %s1164 = scalar_lea.sflag [#allocation4], 1
    %1165 = vsyncpa %s1164, 1
    %1166 = vsyncpa [#allocation7], 1
    %1167 = vsyncpa [#allocation10], 1
    %1168 = vsyncpa [#allocation13], 1
    %s1169 = scalar_lea.sflag [#allocation13], 1
    %1170 = vsyncpa %s1169, 1
    %1171 = vsyncpa [#allocation16], 1
    %1172 = vsyncpa [#allocation5], 1
    %s1173 = scalar_lea.sflag [#allocation5], 1
    %1174 = vsyncpa %s1173, 1

</llo_original>
